<compile_context>
chip_gen: v7x
topology: tpu7x:2x2x1
jax: 0.10.0
libtpu: 0.0.40
codegen_flags: <defaults>
</compile_context>

<pallas_src>
import math

import jax
import jax.numpy as jnp
from jax import lax
from jax.experimental import pallas as pl
from jax.experimental.pallas import tpu as pltpu


def _vmem_limit_bytes() -> int:
    """Generation-conditional VMEM limit: leave headroom on v7x (64 MiB/TC)."""
    cap = 128 * 1024 * 1024
    try:
        cap = int(getattr(pltpu.get_tpu_info(), "vmem_capacity_bytes", cap))
    except Exception:
        pass
    # <= 3/4 of physical VMEM, capped at 64 MiB: 48 MiB on v7x, 64 MiB on v5e/v6e.
    return max(min(64 * 1024 * 1024, (cap * 3) // 4), 32 * 1024 * 1024)


def _make_theseus_layer_kernel(num_heads: int, head_dim: int, hidden: int):
    H = hidden
    hd = head_dim

    def layer_norm(v, g, b, eps=1e-12):
        mu = jnp.mean(v, axis=-1, keepdims=True)
        var = jnp.mean((v - mu) ** 2, axis=-1, keepdims=True)
        return (v - mu) * lax.rsqrt(var + eps) * g + b

    def gelu(v):
        # TODO(synk): exact erf-based GELU ("gelu") replaced by tanh approx
        # ("gelu_new"); erf has no guaranteed Mosaic lowering, tanh uses the EUP.
        c = math.sqrt(2.0 / math.pi)
        return 0.5 * v * (1.0 + jnp.tanh(c * (v + 0.044715 * v * v * v)))

    def kernel(x_ref, mask_ref,
               wqkv_ref, bqkv_ref, wo_ref, bo_ref, ln1g_ref, ln1b_ref,
               wi_ref, bi_ref, w2_ref, b2_ref, ln2g_ref, ln2b_ref,
               out_ref,
               h_scr, q_scr, k_scr, v_scr, acc_scr):
        l = pl.program_id(1)  # layer axis (inner, "arbitrary")

        # At the first layer of every sequence, (re)load the residual stream
        # from HBM input (bf16) into the f32 VMEM scratch.
        @pl.when(l == 0)
        def _():
            h_scr[...] = x_ref[...].astype(jnp.float32)

        x = h_scr[...]                                   # (S, H) f32 residual
        S = x.shape[0]
        m_full = jnp.broadcast_to(mask_ref[...], (S, S))  # hoisted mask broadcast

        xb = x.astype(jnp.bfloat16)

        # Fused QKV projection (Q pre-scaled in the packed weights): one MXU
        # matmul with N = 3H, f32 accumulation, then a single bf16 cast.
        qkv = (jnp.dot(xb, wqkv_ref[...], preferred_element_type=jnp.float32)
               + bqkv_ref[...]).astype(jnp.bfloat16)      # (S, 3H) bf16

        # Stage per-head q/k/v head-major in small bf16 VMEM scratches so the
        # head loop below can index them dynamically (static stores only here).
        for h in range(num_heads):
            q_scr[h] = qkv[:, h * hd:(h + 1) * hd]
            k_scr[h] = qkv[:, H + h * hd:H + (h + 1) * hd]
            v_scr[h] = qkv[:, 2 * H + h * hd:2 * H + (h + 1) * hd]

        # Multi-head attention: fori_loop bounds live ranges to one head; each
        # head's context is folded into the output projection immediately
        # (acc += ctx_h @ Wo[h]) — no lane concat, no separate ctx @ Wo matmul.
        acc_scr[...] = jnp.zeros_like(acc_scr)

        def head_body(h, carry):
            qh = q_scr[h]                                 # (S, hd) bf16
            kh = k_scr[h]
            vh = v_scr[h]
            s = jnp.einsum('qd,kd->qk', qh, kh,
                           preferred_element_type=jnp.float32) + m_full
            s = s - jnp.max(s, axis=-1, keepdims=True)     # stable softmax
            # TODO(synk): on v6e/v7x the exp could run in bf16 (2x EUP
            # throughput); kept f32 so the same kernel is optimal on v5e.
            p = jnp.exp(s)
            p = p * pl.reciprocal(jnp.sum(p, axis=-1, keepdims=True), approx=True)
            ctx_h = jnp.dot(p.astype(jnp.bfloat16), vh,
                            preferred_element_type=jnp.float32)   # (S, hd) f32
            acc_scr[...] += jnp.dot(ctx_h.astype(jnp.bfloat16), wo_ref[h],
                                    preferred_element_type=jnp.float32)
            return carry

        lax.fori_loop(0, num_heads, head_body, 0)

        # Self-attention output bias + residual + LayerNorm (f32).
        x1 = layer_norm(acc_scr[...] + bo_ref[...] + x, ln1g_ref[...], ln1b_ref[...])

        # Feed-forward (intermediate GELU + output) + residual + LayerNorm.
        # TODO(synk): for BERT-large-class shapes on v7x, tile the FFN over the
        # intermediate dim (emit_pipeline / extra grid axis) instead of holding
        # (H,I) and (I,H) wholly in VMEM.
        inter = gelu(jnp.dot(x1.astype(jnp.bfloat16), wi_ref[...],
                             preferred_element_type=jnp.float32) + bi_ref[...])
        ffn = jnp.dot(inter.astype(jnp.bfloat16), w2_ref[...],
                      preferred_element_type=jnp.float32) + b2_ref[...]
        y = layer_norm(ffn + x1, ln2g_ref[...], ln2b_ref[...])

        # Carry the residual stream to the next layer and write this layer's
        # hidden state (bf16) to HBM.
        h_scr[...] = y
        out_ref[...] = y.astype(out_ref.dtype)

    return kernel


def pack_bert_layer_params(p, num_heads):
    """Fuse Q/K/V (Q pre-scaled by 1/sqrt(head_dim)), reshape Wo head-major,
    and cast matmul weights to bf16. Biases / LayerNorm params stay f32."""
    H = p["wq"].shape[0]
    hd = H // num_heads
    scale = 1.0 / math.sqrt(hd)
    return dict(
        wqkv=jnp.concatenate([p["wq"] * scale, p["wk"], p["wv"]],
                             axis=1).astype(jnp.bfloat16),          # (H, 3H)
        bqkv=jnp.concatenate([p["bq"] * scale, p["bk"], p["bv"]], axis=1),  # (1, 3H)
        wo=p["wo"].reshape(num_heads, hd, H).astype(jnp.bfloat16),   # (NH, hd, H)
        bo=p["bo"],
        ln1_g=p["ln1_g"], ln1_b=p["ln1_b"],
        wi=p["wi"].astype(jnp.bfloat16), bi=p["bi"],
        w2=p["w2"].astype(jnp.bfloat16), b2=p["b2"],
        ln2_g=p["ln2_g"], ln2_b=p["ln2_b"],
    )


def _stack_layers(packed_list):
    return jax.tree_util.tree_map(lambda *xs: jnp.stack(xs, axis=0), *packed_list)


def theseus_encoder_layers(x_bf16, mask_add, stacked, num_heads):
    """Run all successor layers in one pallas_call.

    x_bf16: (B, S, H) bf16; mask_add: (B, 1, S) f32 additive mask.
    Returns (L, B, S, H) bf16 per-layer hidden states.
    """
    B, S, H = x_bf16.shape
    L = stacked["wqkv"].shape[0]
    I = stacked["wi"].shape[2]
    hd = H // num_heads
    kernel = _make_theseus_layer_kernel(num_heads, hd, H)

    def wspec(*dims):
        # Weight blocks vary along the inner layer axis -> default double
        # buffering prefetches layer l+1 weights while layer l computes.
        nd = len(dims)
        return pl.BlockSpec((None,) + dims, lambda b, l, _n=nd: (l,) + (0,) * _n)

    in_specs = [
        pl.BlockSpec((None, S, H), lambda b, l: (b, 0, 0)),   # hidden states (bf16)
        pl.BlockSpec((None, 1, S), lambda b, l: (b, 0, 0)),   # additive attention mask
        wspec(H, 3 * H), wspec(1, 3 * H),                     # fused wqkv, bqkv
        wspec(num_heads, hd, H), wspec(1, H),                 # wo (head-major), bo
        wspec(1, H), wspec(1, H),                             # ln1 gamma, beta
        wspec(H, I), wspec(1, I),                             # wi, bi
        wspec(I, H), wspec(1, H),                             # w2, b2
        wspec(1, H), wspec(1, H),                             # ln2 gamma, beta
    ]
    out_spec = pl.BlockSpec((None, None, S, H), lambda b, l: (l, b, 0, 0))

    scratch_shapes = [
        pltpu.VMEM((S, H), jnp.float32),                  # residual stream (f32)
        pltpu.VMEM((num_heads, S, hd), jnp.bfloat16),     # q (head-major)
        pltpu.VMEM((num_heads, S, hd), jnp.bfloat16),     # k
        pltpu.VMEM((num_heads, S, hd), jnp.bfloat16),     # v
        pltpu.VMEM((S, H), jnp.float32),                  # attn-output accumulator
    ]

    # Advisory cost estimate so XLA can schedule around this fused call.
    flops = L * B * S * (8 * H * H + 4 * H * I + 4 * S * H)
    transcendentals = L * B * (num_heads * S * S + S * I)
    bytes_accessed = (B * S * H * 2 + B * S * 4 + L * B * S * H * 2
                      + L * (2 * (4 * H * H + 2 * H * I) + 4 * (8 * H + I)))

    return pl.pallas_call(
        kernel,
        out_shape=jax.ShapeDtypeStruct((L, B, S, H), jnp.bfloat16),
        grid=(B, L),
        in_specs=in_specs,
        out_specs=out_spec,
        scratch_shapes=scratch_shapes,
        compiler_params=pltpu.CompilerParams(
            # Batch axis feeds megacore (needs B >= 2 on v7x to keep both TCs
            # busy); layer axis is sequential (residual carried in VMEM scratch).
            dimension_semantics=("parallel", "arbitrary"),
            vmem_limit_bytes=_vmem_limit_bytes(),
        ),
        cost_estimate=pl.CostEstimate(
            flops=flops, transcendentals=transcendentals,
            bytes_accessed=bytes_accessed),
    )(x_bf16, mask_add,
      stacked["wqkv"], stacked["bqkv"], stacked["wo"], stacked["bo"],
      stacked["ln1_g"], stacked["ln1_b"],
      stacked["wi"], stacked["bi"], stacked["w2"], stacked["b2"],
      stacked["ln2_g"], stacked["ln2_b"])


def theseus_bert_encoder_forward(hidden_states, attention_mask, successor_params,
                                 num_heads, output_hidden_states=True):
    """Inference-time TheseusBertEncoder: every predecessor block is replaced by
    its successor layer, so the successor layers run sequentially (fused into a
    single Pallas call with a layer grid axis).

    # TODO(synk): training-mode Bernoulli layer sampling (module replacement),
    # per-layer head_mask and output_attentions are host-side / not part of the
    # kernel.
    """
    B, S, H = hidden_states.shape
    L = len(successor_params)

    # HF-style extended additive mask: 0 where attended, -10000 where masked.
    mask_add = (1.0 - attention_mask)[:, None, :] * -10000.0  # (B, 1, S) f32

    stacked = _stack_layers([pack_bert_layer_params(p, num_heads)
                             for p in successor_params])

    # Inter-layer hidden states cross the kernel boundary in bf16.
    x_bf16 = hidden_states.astype(jnp.bfloat16)
    hiddens = theseus_encoder_layers(x_bf16, mask_add, stacked, num_heads)  # (L,B,S,H)

    last_hidden = hiddens[L - 1]
    all_hidden = ()
    if output_hidden_states:
        all_hidden = (hidden_states,) + tuple(hiddens[l] for l in range(L))
    return last_hidden, all_hidden


def init_bert_layer_params(key, H, I):
    ks = jax.random.split(key, 6)
    w = lambda k, shape: jax.random.normal(k, shape, jnp.float32) * 0.02
    return dict(
        wq=w(ks[0], (H, H)), bq=jnp.zeros((1, H), jnp.float32),
        wk=w(ks[1], (H, H)), bk=jnp.zeros((1, H), jnp.float32),
        wv=w(ks[2], (H, H)), bv=jnp.zeros((1, H), jnp.float32),
        wo=w(ks[3], (H, H)), bo=jnp.zeros((1, H), jnp.float32),
        ln1_g=jnp.ones((1, H), jnp.float32), ln1_b=jnp.zeros((1, H), jnp.float32),
        wi=w(ks[4], (H, I)), bi=jnp.zeros((1, I), jnp.float32),
        w2=w(ks[5], (I, H)), b2=jnp.zeros((1, H), jnp.float32),
        ln2_g=jnp.ones((1, H), jnp.float32), ln2_b=jnp.zeros((1, H), jnp.float32),
    )


if __name__ == "__main__":
    # Small config consistent with the module: hidden=32, 4 heads, intermediate=64,
    # num_hidden_layers=4 predecessors compressed into nb_successor_layers=2.
    # (Note: these sub-tile shapes exercise correctness only; real BERT shapes
    # are lane-dense and are what the tiling/pipelining above is designed for.)
    B, S, H, NH, I = 2, 8, 32, 4, 64
    nb_successor_layers = 2

    key = jax.random.PRNGKey(0)
    key, xk = jax.random.split(key)
    hidden_states = jax.random.normal(xk, (B, S, H), jnp.float32)
    attention_mask = jnp.ones((B, S), jnp.float32)  # all tokens attended

    successor_params = []
    for _ in range(nb_successor_layers):
        key, lk = jax.random.split(key)
        successor_params.append(init_bert_layer_params(lk, H, I))

    last_hidden, all_hidden = theseus_bert_encoder_forward(
        hidden_states, attention_mask, successor_params, NH,
        output_hidden_states=True)
    last_hidden = jax.block_until_ready(last_hidden)

    assert last_hidden.shape == (B, S, H)
    assert len(all_hidden) == nb_successor_layers + 1
    assert bool(jnp.all(jnp.isfinite(last_hidden.astype(jnp.float32))))
    print("KERNEL_OK")
</pallas_src>

<mosaic_0001>
module attributes {stable_mosaic.version = 11 : i64} {
  func.func @kernel(%arg0: i32, %arg1: i32, %arg2: memref<1x8x32xbf16, #tpu.memory_space<vmem>>, %arg3: memref<1x1x8xf32, #tpu.memory_space<vmem>>, %arg4: memref<1x32x96xbf16, #tpu.memory_space<vmem>>, %arg5: memref<1x1x96xf32, #tpu.memory_space<vmem>>, %arg6: memref<1x4x8x32xbf16, #tpu.memory_space<vmem>>, %arg7: memref<1x1x32xf32, #tpu.memory_space<vmem>>, %arg8: memref<1x1x32xf32, #tpu.memory_space<vmem>>, %arg9: memref<1x1x32xf32, #tpu.memory_space<vmem>>, %arg10: memref<1x32x64xbf16, #tpu.memory_space<vmem>>, %arg11: memref<1x1x64xf32, #tpu.memory_space<vmem>>, %arg12: memref<1x64x32xbf16, #tpu.memory_space<vmem>>, %arg13: memref<1x1x32xf32, #tpu.memory_space<vmem>>, %arg14: memref<1x1x32xf32, #tpu.memory_space<vmem>>, %arg15: memref<1x1x32xf32, #tpu.memory_space<vmem>>, %arg16: memref<1x1x8x32xbf16, #tpu.memory_space<vmem>>, %arg17: memref<8x32xf32, #tpu.memory_space<vmem>>, %arg18: memref<4x8x8xbf16, #tpu.memory_space<vmem>>, %arg19: memref<4x8x8xbf16, #tpu.memory_space<vmem>>, %arg20: memref<4x8x8xbf16, #tpu.memory_space<vmem>>, %arg21: memref<8x32xf32, #tpu.memory_space<vmem>>) attributes {dimension_semantics = [#tpu.dimension_semantics<parallel>, #tpu.dimension_semantics<arbitrary>], iteration_bounds = array<i64: 2, 2>, scalar_prefetch = 0 : i64, scratch_operands = 5 : i64, tpu.core_type = #tpu.core_type<tc>, window_params = [{transform_indices = @transform_0, window_bounds = array<i64: 1, 8, 32>}, {transform_indices = @transform_1, window_bounds = array<i64: 1, 1, 8>}, {transform_indices = @transform_2, window_bounds = array<i64: 1, 32, 96>}, {transform_indices = @transform_3, window_bounds = array<i64: 1, 1, 96>}, {transform_indices = @transform_4, window_bounds = array<i64: 1, 4, 8, 32>}, {transform_indices = @transform_5, window_bounds = array<i64: 1, 1, 32>}, {transform_indices = @transform_6, window_bounds = array<i64: 1, 1, 32>}, {transform_indices = @transform_7, window_bounds = array<i64: 1, 1, 32>}, {transform_indices = @transform_8, window_bounds = array<i64: 1, 32, 64>}, {transform_indices = @transform_9, window_bounds = array<i64: 1, 1, 64>}, {transform_indices = @transform_10, window_bounds = array<i64: 1, 64, 32>}, {transform_indices = @transform_11, window_bounds = array<i64: 1, 1, 32>}, {transform_indices = @transform_12, window_bounds = array<i64: 1, 1, 32>}, {transform_indices = @transform_13, window_bounds = array<i64: 1, 1, 32>}, {transform_indices = @transform_14, window_bounds = array<i64: 1, 1, 8, 32>}]} {
    %c0_i32 = arith.constant 0 : i32
    %0 = arith.cmpi eq, %arg1, %c0_i32 : i32
    %1 = arith.extui %0 : i1 to i32
    %c0_i32_0 = arith.constant 0 : i32
    %2 = arith.cmpi ne, %1, %c0_i32_0 : i32
    scf.if %2 {
      %c0_100 = arith.constant 0 : index
      %c0_101 = arith.constant 0 : index
      %c0_102 = arith.constant 0 : index
      %161 = vector.load %arg2[%c0_100, %c0_101, %c0_102] : memref<1x8x32xbf16, #tpu.memory_space<vmem>>, vector<1x8x32xbf16>
      %162 = vector.shape_cast %161 : vector<1x8x32xbf16> to vector<8x32xbf16>
      %163 = arith.extf %162 : vector<8x32xbf16> to vector<8x32xf32>
      %c0_103 = arith.constant 0 : index
      %c0_104 = arith.constant 0 : index
      %164 = vector.load %arg17[%c0_103, %c0_104] : memref<8x32xf32, #tpu.memory_space<vmem>>, vector<8x32xf32>
      tpu.vector_store %arg17[%c0_103, %c0_104], %163 {strides = array<i32>} : memref<8x32xf32, #tpu.memory_space<vmem>>, vector<8x32xf32>,
    } else {
    }
    %c0 = arith.constant 0 : index
    %c0_1 = arith.constant 0 : index
    %3 = vector.load %arg17[%c0, %c0_1] : memref<8x32xf32, #tpu.memory_space<vmem>>, vector<8x32xf32>
    %c0_2 = arith.constant 0 : index
    %c0_3 = arith.constant 0 : index
    %c0_4 = arith.constant 0 : index
    %4 = vector.load %arg3[%c0_2, %c0_3, %c0_4] : memref<1x1x8xf32, #tpu.memory_space<vmem>>, vector<1x1x8xf32>
    %5 = vector.shape_cast %4 : vector<1x1x8xf32> to vector<1x8xf32>
    %6 = vector.shape_cast %5 : vector<1x8xf32> to vector<1x8xf32>
    %7 = vector.broadcast %6 : vector<1x8xf32> to vector<8x8xf32>
    %8 = arith.truncf %3 : vector<8x32xf32> to vector<8x32xbf16>
    %c0_5 = arith.constant 0 : index
    %c0_6 = arith.constant 0 : index
    %c0_7 = arith.constant 0 : index
    %9 = vector.load %arg4[%c0_5, %c0_6, %c0_7] : memref<1x32x96xbf16, #tpu.memory_space<vmem>>, vector<1x32x96xbf16>
    %10 = vector.shape_cast %9 : vector<1x32x96xbf16> to vector<32x96xbf16>
    %cst = arith.constant dense<0.000000e+00> : vector<8x96xf32>
    %11 = tpu.matmul %8, %10, %cst {dimension_numbers = #tpu.dot_dimension_numbers<[1], [0], [0], [1], [0, 0, 1, 1], [], []>} : vector<8x32xbf16>, vector<32x96xbf16>, vector<8x96xf32> -> vector<8x96xf32>
    %c0_8 = arith.constant 0 : index
    %c0_9 = arith.constant 0 : index
    %c0_10 = arith.constant 0 : index
    %12 = vector.load %arg5[%c0_8, %c0_9, %c0_10] : memref<1x1x96xf32, #tpu.memory_space<vmem>>, vector<1x1x96xf32>
    %13 = vector.shape_cast %12 : vector<1x1x96xf32> to vector<1x96xf32>
    %14 = vector.broadcast %13 : vector<1x96xf32> to vector<8x96xf32>
    %15 = arith.addf %11, %14 : vector<8x96xf32>
    %16 = arith.truncf %15 : vector<8x96xf32> to vector<8x96xbf16>
    %17 = vector.extract_strided_slice %16 {offsets = [0, 0], sizes = [8, 8], strides = [1, 1]} : vector<8x96xbf16> to vector<8x8xbf16>
    %c0_11 = arith.constant 0 : index
    %c0_12 = arith.constant 0 : index
    %c0_13 = arith.constant 0 : index
    %18 = vector.load %arg18[%c0_11, %c0_12, %c0_13] : memref<4x8x8xbf16, #tpu.memory_space<vmem>>, vector<1x8x8xbf16>
    %19 = vector.shape_cast %18 : vector<1x8x8xbf16> to vector<8x8xbf16>
    %20 = vector.shape_cast %17 : vector<8x8xbf16> to vector<1x8x8xbf16>
    tpu.vector_store %arg18[%c0_11, %c0_12, %c0_13], %20 {strides = array<i32>} : memref<4x8x8xbf16, #tpu.memory_space<vmem>>, vector<1x8x8xbf16>,
    %21 = vector.extract_strided_slice %16 {offsets = [0, 32], sizes = [8, 8], strides = [1, 1]} : vector<8x96xbf16> to vector<8x8xbf16>
    %c0_14 = arith.constant 0 : index
    %c0_15 = arith.constant 0 : index
    %c0_16 = arith.constant 0 : index
    %22 = vector.load %arg19[%c0_14, %c0_15, %c0_16] : memref<4x8x8xbf16, #tpu.memory_space<vmem>>, vector<1x8x8xbf16>
    %23 = vector.shape_cast %22 : vector<1x8x8xbf16> to vector<8x8xbf16>
    %24 = vector.shape_cast %21 : vector<8x8xbf16> to vector<1x8x8xbf16>
    tpu.vector_store %arg19[%c0_14, %c0_15, %c0_16], %24 {strides = array<i32>} : memref<4x8x8xbf16, #tpu.memory_space<vmem>>, vector<1x8x8xbf16>,
    %25 = vector.extract_strided_slice %16 {offsets = [0, 64], sizes = [8, 8], strides = [1, 1]} : vector<8x96xbf16> to vector<8x8xbf16>
    %c0_17 = arith.constant 0 : index
    %c0_18 = arith.constant 0 : index
    %c0_19 = arith.constant 0 : index
    %26 = vector.load %arg20[%c0_17, %c0_18, %c0_19] : memref<4x8x8xbf16, #tpu.memory_space<vmem>>, vector<1x8x8xbf16>
    %27 = vector.shape_cast %26 : vector<1x8x8xbf16> to vector<8x8xbf16>
    %28 = vector.shape_cast %25 : vector<8x8xbf16> to vector<1x8x8xbf16>
    tpu.vector_store %arg20[%c0_17, %c0_18, %c0_19], %28 {strides = array<i32>} : memref<4x8x8xbf16, #tpu.memory_space<vmem>>, vector<1x8x8xbf16>,
    %29 = vector.extract_strided_slice %16 {offsets = [0, 8], sizes = [8, 8], strides = [1, 1]} : vector<8x96xbf16> to vector<8x8xbf16>
    %c1 = arith.constant 1 : index
    %c0_20 = arith.constant 0 : index
    %c0_21 = arith.constant 0 : index
    %30 = vector.load %arg18[%c1, %c0_20, %c0_21] : memref<4x8x8xbf16, #tpu.memory_space<vmem>>, vector<1x8x8xbf16>
    %31 = vector.shape_cast %30 : vector<1x8x8xbf16> to vector<8x8xbf16>
    %32 = vector.shape_cast %29 : vector<8x8xbf16> to vector<1x8x8xbf16>
    tpu.vector_store %arg18[%c1, %c0_20, %c0_21], %32 {strides = array<i32>} : memref<4x8x8xbf16, #tpu.memory_space<vmem>>, vector<1x8x8xbf16>,
    %33 = vector.extract_strided_slice %16 {offsets = [0, 40], sizes = [8, 8], strides = [1, 1]} : vector<8x96xbf16> to vector<8x8xbf16>
    %c1_22 = arith.constant 1 : index
    %c0_23 = arith.constant 0 : index
    %c0_24 = arith.constant 0 : index
    %34 = vector.load %arg19[%c1_22, %c0_23, %c0_24] : memref<4x8x8xbf16, #tpu.memory_space<vmem>>, vector<1x8x8xbf16>
    %35 = vector.shape_cast %34 : vector<1x8x8xbf16> to vector<8x8xbf16>
    %36 = vector.shape_cast %33 : vector<8x8xbf16> to vector<1x8x8xbf16>
    tpu.vector_store %arg19[%c1_22, %c0_23, %c0_24], %36 {strides = array<i32>} : memref<4x8x8xbf16, #tpu.memory_space<vmem>>, vector<1x8x8xbf16>,
    %37 = vector.extract_strided_slice %16 {offsets = [0, 72], sizes = [8, 8], strides = [1, 1]} : vector<8x96xbf16> to vector<8x8xbf16>
    %c1_25 = arith.constant 1 : index
    %c0_26 = arith.constant 0 : index
    %c0_27 = arith.constant 0 : index
    %38 = vector.load %arg20[%c1_25, %c0_26, %c0_27] : memref<4x8x8xbf16, #tpu.memory_space<vmem>>, vector<1x8x8xbf16>
    %39 = vector.shape_cast %38 : vector<1x8x8xbf16> to vector<8x8xbf16>
    %40 = vector.shape_cast %37 : vector<8x8xbf16> to vector<1x8x8xbf16>
    tpu.vector_store %arg20[%c1_25, %c0_26, %c0_27], %40 {strides = array<i32>} : memref<4x8x8xbf16, #tpu.memory_space<vmem>>, vector<1x8x8xbf16>,
    %41 = vector.extract_strided_slice %16 {offsets = [0, 16], sizes = [8, 8], strides = [1, 1]} : vector<8x96xbf16> to vector<8x8xbf16>
    %c2 = arith.constant 2 : index
    %c0_28 = arith.constant 0 : index
    %c0_29 = arith.constant 0 : index
    %42 = vector.load %arg18[%c2, %c0_28, %c0_29] : memref<4x8x8xbf16, #tpu.memory_space<vmem>>, vector<1x8x8xbf16>
    %43 = vector.shape_cast %42 : vector<1x8x8xbf16> to vector<8x8xbf16>
    %44 = vector.shape_cast %41 : vector<8x8xbf16> to vector<1x8x8xbf16>
    tpu.vector_store %arg18[%c2, %c0_28, %c0_29], %44 {strides = array<i32>} : memref<4x8x8xbf16, #tpu.memory_space<vmem>>, vector<1x8x8xbf16>,
    %45 = vector.extract_strided_slice %16 {offsets = [0, 48], sizes = [8, 8], strides = [1, 1]} : vector<8x96xbf16> to vector<8x8xbf16>
    %c2_30 = arith.constant 2 : index
    %c0_31 = arith.constant 0 : index
    %c0_32 = arith.constant 0 : index
    %46 = vector.load %arg19[%c2_30, %c0_31, %c0_32] : memref<4x8x8xbf16, #tpu.memory_space<vmem>>, vector<1x8x8xbf16>
    %47 = vector.shape_cast %46 : vector<1x8x8xbf16> to vector<8x8xbf16>
    %48 = vector.shape_cast %45 : vector<8x8xbf16> to vector<1x8x8xbf16>
    tpu.vector_store %arg19[%c2_30, %c0_31, %c0_32], %48 {strides = array<i32>} : memref<4x8x8xbf16, #tpu.memory_space<vmem>>, vector<1x8x8xbf16>,
    %49 = vector.extract_strided_slice %16 {offsets = [0, 80], sizes = [8, 8], strides = [1, 1]} : vector<8x96xbf16> to vector<8x8xbf16>
    %c2_33 = arith.constant 2 : index
    %c0_34 = arith.constant 0 : index
    %c0_35 = arith.constant 0 : index
    %50 = vector.load %arg20[%c2_33, %c0_34, %c0_35] : memref<4x8x8xbf16, #tpu.memory_space<vmem>>, vector<1x8x8xbf16>
    %51 = vector.shape_cast %50 : vector<1x8x8xbf16> to vector<8x8xbf16>
    %52 = vector.shape_cast %49 : vector<8x8xbf16> to vector<1x8x8xbf16>
    tpu.vector_store %arg20[%c2_33, %c0_34, %c0_35], %52 {strides = array<i32>} : memref<4x8x8xbf16, #tpu.memory_space<vmem>>, vector<1x8x8xbf16>,
    %53 = vector.extract_strided_slice %16 {offsets = [0, 24], sizes = [8, 8], strides = [1, 1]} : vector<8x96xbf16> to vector<8x8xbf16>
    %c3 = arith.constant 3 : index
    %c0_36 = arith.constant 0 : index
    %c0_37 = arith.constant 0 : index
    %54 = vector.load %arg18[%c3, %c0_36, %c0_37] : memref<4x8x8xbf16, #tpu.memory_space<vmem>>, vector<1x8x8xbf16>
    %55 = vector.shape_cast %54 : vector<1x8x8xbf16> to vector<8x8xbf16>
    %56 = vector.shape_cast %53 : vector<8x8xbf16> to vector<1x8x8xbf16>
    tpu.vector_store %arg18[%c3, %c0_36, %c0_37], %56 {strides = array<i32>} : memref<4x8x8xbf16, #tpu.memory_space<vmem>>, vector<1x8x8xbf16>,
    %57 = vector.extract_strided_slice %16 {offsets = [0, 56], sizes = [8, 8], strides = [1, 1]} : vector<8x96xbf16> to vector<8x8xbf16>
    %c3_38 = arith.constant 3 : index
    %c0_39 = arith.constant 0 : index
    %c0_40 = arith.constant 0 : index
    %58 = vector.load %arg19[%c3_38, %c0_39, %c0_40] : memref<4x8x8xbf16, #tpu.memory_space<vmem>>, vector<1x8x8xbf16>
    %59 = vector.shape_cast %58 : vector<1x8x8xbf16> to vector<8x8xbf16>
    %60 = vector.shape_cast %57 : vector<8x8xbf16> to vector<1x8x8xbf16>
    tpu.vector_store %arg19[%c3_38, %c0_39, %c0_40], %60 {strides = array<i32>} : memref<4x8x8xbf16, #tpu.memory_space<vmem>>, vector<1x8x8xbf16>,
    %61 = vector.extract_strided_slice %16 {offsets = [0, 88], sizes = [8, 8], strides = [1, 1]} : vector<8x96xbf16> to vector<8x8xbf16>
    %c3_41 = arith.constant 3 : index
    %c0_42 = arith.constant 0 : index
    %c0_43 = arith.constant 0 : index
    %62 = vector.load %arg20[%c3_41, %c0_42, %c0_43] : memref<4x8x8xbf16, #tpu.memory_space<vmem>>, vector<1x8x8xbf16>
    %63 = vector.shape_cast %62 : vector<1x8x8xbf16> to vector<8x8xbf16>
    %64 = vector.shape_cast %61 : vector<8x8xbf16> to vector<1x8x8xbf16>
    tpu.vector_store %arg20[%c3_41, %c0_42, %c0_43], %64 {strides = array<i32>} : memref<4x8x8xbf16, #tpu.memory_space<vmem>>, vector<1x8x8xbf16>,
    %cst_44 = arith.constant 0.000000e+00 : f32
    %65 = vector.broadcast %cst_44 : f32 to vector<8x32xf32>
    %c0_45 = arith.constant 0 : index
    %c0_46 = arith.constant 0 : index
    %66 = vector.load %arg21[%c0_45, %c0_46] : memref<8x32xf32, #tpu.memory_space<vmem>>, vector<8x32xf32>
    tpu.vector_store %arg21[%c0_45, %c0_46], %65 {strides = array<i32>} : memref<8x32xf32, #tpu.memory_space<vmem>>, vector<8x32xf32>,
    %c0_i32_47 = arith.constant 0 : i32
    %c4_i32 = arith.constant 4 : i32
    %67 = arith.addi %c0_i32_47, %c4_i32 : i32
    %c1_i32 = arith.constant 1 : i32
    scf.for %arg22 = %c0_i32_47 to %67 step %c1_i32  : i32 {
      %161 = arith.index_cast %arg22 : i32 to index
      %c0_100 = arith.constant 0 : index
      %c0_101 = arith.constant 0 : index
      %162 = vector.load %arg18[%161, %c0_100, %c0_101] : memref<4x8x8xbf16, #tpu.memory_space<vmem>>, vector<1x8x8xbf16>
      %163 = vector.shape_cast %162 : vector<1x8x8xbf16> to vector<8x8xbf16>
      %164 = arith.index_cast %arg22 : i32 to index
      %c0_102 = arith.constant 0 : index
      %c0_103 = arith.constant 0 : index
      %165 = vector.load %arg19[%164, %c0_102, %c0_103] : memref<4x8x8xbf16, #tpu.memory_space<vmem>>, vector<1x8x8xbf16>
      %166 = vector.shape_cast %165 : vector<1x8x8xbf16> to vector<8x8xbf16>
      %167 = arith.index_cast %arg22 : i32 to index
      %c0_104 = arith.constant 0 : index
      %c0_105 = arith.constant 0 : index
      %168 = vector.load %arg20[%167, %c0_104, %c0_105] : memref<4x8x8xbf16, #tpu.memory_space<vmem>>, vector<1x8x8xbf16>
      %169 = vector.shape_cast %168 : vector<1x8x8xbf16> to vector<8x8xbf16>
      "tpu.trace_start"() <{level = 10 : i32, message = "qd,kd->qk"}> : () -> ()
      %cst_106 = arith.constant dense<0.000000e+00> : vector<8x8xf32>
      %170 = tpu.matmul %163, %166, %cst_106 {dimension_numbers = #tpu.dot_dimension_numbers<[1], [1], [0], [0], [0, 0, 1, 0], [], []>} : vector<8x8xbf16>, vector<8x8xbf16>, vector<8x8xf32> -> vector<8x8xf32>
      "tpu.trace_stop"() : () -> ()
      %171 = arith.addf %170, %7 : vector<8x8xf32>
      %cst_107 = arith.constant dense<0xFF800000> : vector<8xf32>
      %172 = vector.multi_reduction <maximumf>, %171, %cst_107 [1] : vector<8x8xf32> to vector<8xf32>
      %173 = vector.shape_cast %172 : vector<8xf32> to vector<8x1xf32>
      %174 = vector.broadcast %173 : vector<8x1xf32> to vector<8x8xf32>
      %175 = arith.subf %171, %174 : vector<8x8xf32>
      %176 = math.exp %175 : vector<8x8xf32>
      %cst_108 = arith.constant dense<0.000000e+00> : vector<8xf32>
      %177 = vector.multi_reduction <add>, %176, %cst_108 [1] : vector<8x8xf32> to vector<8xf32>
      %178 = vector.shape_cast %177 : vector<8xf32> to vector<8x1xf32>
      %179 = tpu.reciprocal %178 {approx = true} : vector<8x1xf32> -> vector<8x1xf32>
      %180 = vector.broadcast %179 : vector<8x1xf32> to vector<8x8xf32>
      %181 = arith.mulf %176, %180 : vector<8x8xf32>
      %182 = arith.truncf %181 : vector<8x8xf32> to vector<8x8xbf16>
      %cst_109 = arith.constant dense<0.000000e+00> : vector<8x8xf32>
      %183 = tpu.matmul %182, %169, %cst_109 {dimension_numbers = #tpu.dot_dimension_numbers<[1], [0], [0], [1], [0, 0, 1, 1], [], []>} : vector<8x8xbf16>, vector<8x8xbf16>, vector<8x8xf32> -> vector<8x8xf32>
      %c0_110 = arith.constant 0 : index
      %c0_111 = arith.constant 0 : index
      %184 = vector.load %arg21[%c0_110, %c0_111] : memref<8x32xf32, #tpu.memory_space<vmem>>, vector<8x32xf32>
      %185 = arith.truncf %183 : vector<8x8xf32> to vector<8x8xbf16>
      %c0_112 = arith.constant 0 : index
      %186 = arith.index_cast %arg22 : i32 to index
      %c0_113 = arith.constant 0 : index
      %c0_114 = arith.constant 0 : index
      %187 = vector.load %arg6[%c0_112, %186, %c0_113, %c0_114] : memref<1x4x8x32xbf16, #tpu.memory_space<vmem>>, vector<1x1x8x32xbf16>
      %188 = vector.shape_cast %187 : vector<1x1x8x32xbf16> to vector<8x32xbf16>
      %cst_115 = arith.constant dense<0.000000e+00> : vector<8x32xf32>
      %189 = tpu.matmul %185, %188, %cst_115 {dimension_numbers = #tpu.dot_dimension_numbers<[1], [0], [0], [1], [0, 0, 1, 1], [], []>} : vector<8x8xbf16>, vector<8x32xbf16>, vector<8x32xf32> -> vector<8x32xf32>
      %190 = arith.addf %184, %189 : vector<8x32xf32>
      %c0_116 = arith.constant 0 : index
      %c0_117 = arith.constant 0 : index
      %191 = vector.load %arg21[%c0_116, %c0_117] : memref<8x32xf32, #tpu.memory_space<vmem>>, vector<8x32xf32>
      tpu.vector_store %arg21[%c0_116, %c0_117], %190 {strides = array<i32>} : memref<8x32xf32, #tpu.memory_space<vmem>>, vector<8x32xf32>,
    }
    %c4_i32_48 = arith.constant 4 : i32
    %c0_49 = arith.constant 0 : index
    %c0_50 = arith.constant 0 : index
    %68 = vector.load %arg21[%c0_49, %c0_50] : memref<8x32xf32, #tpu.memory_space<vmem>>, vector<8x32xf32>
    %c0_51 = arith.constant 0 : index
    %c0_52 = arith.constant 0 : index
    %c0_53 = arith.constant 0 : index
    %69 = vector.load %arg7[%c0_51, %c0_52, %c0_53] : memref<1x1x32xf32, #tpu.memory_space<vmem>>, vector<1x1x32xf32>
    %70 = vector.shape_cast %69 : vector<1x1x32xf32> to vector<1x32xf32>
    %71 = vector.broadcast %70 : vector<1x32xf32> to vector<8x32xf32>
    %72 = arith.addf %68, %71 : vector<8x32xf32>
    %73 = arith.addf %72, %3 : vector<8x32xf32>
    %c0_54 = arith.constant 0 : index
    %c0_55 = arith.constant 0 : index
    %c0_56 = arith.constant 0 : index
    %74 = vector.load %arg8[%c0_54, %c0_55, %c0_56] : memref<1x1x32xf32, #tpu.memory_space<vmem>>, vector<1x1x32xf32>
    %75 = vector.shape_cast %74 : vector<1x1x32xf32> to vector<1x32xf32>
    %c0_57 = arith.constant 0 : index
    %c0_58 = arith.constant 0 : index
    %c0_59 = arith.constant 0 : index
    %76 = vector.load %arg9[%c0_57, %c0_58, %c0_59] : memref<1x1x32xf32, #tpu.memory_space<vmem>>, vector<1x1x32xf32>
    %77 = vector.shape_cast %76 : vector<1x1x32xf32> to vector<1x32xf32>
    %cst_60 = arith.constant dense<0.000000e+00> : vector<8xf32>
    %78 = vector.multi_reduction <add>, %73, %cst_60 [1] : vector<8x32xf32> to vector<8xf32>
    %79 = vector.shape_cast %78 : vector<8xf32> to vector<8x1xf32>
    %cst_61 = arith.constant 3.200000e+01 : f32
    %80 = vector.broadcast %cst_61 : f32 to vector<8x1xf32>
    %81 = arith.divf %79, %80 : vector<8x1xf32>
    %82 = vector.broadcast %81 : vector<8x1xf32> to vector<8x32xf32>
    %83 = arith.subf %73, %82 : vector<8x32xf32>
    %84 = arith.mulf %83, %83 : vector<8x32xf32>
    %cst_62 = arith.constant dense<0.000000e+00> : vector<8xf32>
    %85 = vector.multi_reduction <add>, %84, %cst_62 [1] : vector<8x32xf32> to vector<8xf32>
    %86 = vector.shape_cast %85 : vector<8xf32> to vector<8x1xf32>
    %cst_63 = arith.constant 3.200000e+01 : f32
    %87 = vector.broadcast %cst_63 : f32 to vector<8x1xf32>
    %88 = arith.divf %86, %87 : vector<8x1xf32>
    %89 = vector.broadcast %81 : vector<8x1xf32> to vector<8x32xf32>
    %90 = arith.subf %73, %89 : vector<8x32xf32>
    %cst_64 = arith.constant 9.99999996E-13 : f32
    %91 = vector.broadcast %cst_64 : f32 to vector<8x1xf32>
    %92 = arith.addf %88, %91 : vector<8x1xf32>
    %93 = math.rsqrt %92 : vector<8x1xf32>
    %94 = vector.broadcast %93 : vector<8x1xf32> to vector<8x32xf32>
    %95 = arith.mulf %90, %94 : vector<8x32xf32>
    %96 = vector.broadcast %75 : vector<1x32xf32> to vector<8x32xf32>
    %97 = arith.mulf %95, %96 : vector<8x32xf32>
    %98 = vector.broadcast %77 : vector<1x32xf32> to vector<8x32xf32>
    %99 = arith.addf %97, %98 : vector<8x32xf32>
    %100 = arith.truncf %99 : vector<8x32xf32> to vector<8x32xbf16>
    %c0_65 = arith.constant 0 : index
    %c0_66 = arith.constant 0 : index
    %c0_67 = arith.constant 0 : index
    %101 = vector.load %arg10[%c0_65, %c0_66, %c0_67] : memref<1x32x64xbf16, #tpu.memory_space<vmem>>, vector<1x32x64xbf16>
    %102 = vector.shape_cast %101 : vector<1x32x64xbf16> to vector<32x64xbf16>
    %cst_68 = arith.constant dense<0.000000e+00> : vector<8x64xf32>
    %103 = tpu.matmul %100, %102, %cst_68 {dimension_numbers = #tpu.dot_dimension_numbers<[1], [0], [0], [1], [0, 0, 1, 1], [], []>} : vector<8x32xbf16>, vector<32x64xbf16>, vector<8x64xf32> -> vector<8x64xf32>
    %c0_69 = arith.constant 0 : index
    %c0_70 = arith.constant 0 : index
    %c0_71 = arith.constant 0 : index
    %104 = vector.load %arg11[%c0_69, %c0_70, %c0_71] : memref<1x1x64xf32, #tpu.memory_space<vmem>>, vector<1x1x64xf32>
    %105 = vector.shape_cast %104 : vector<1x1x64xf32> to vector<1x64xf32>
    %106 = vector.broadcast %105 : vector<1x64xf32> to vector<8x64xf32>
    %107 = arith.addf %103, %106 : vector<8x64xf32>
    %cst_72 = arith.constant 5.000000e-01 : f32
    %108 = vector.broadcast %cst_72 : f32 to vector<8x64xf32>
    %109 = arith.mulf %108, %107 : vector<8x64xf32>
    %cst_73 = arith.constant 4.471500e-02 : f32
    %110 = vector.broadcast %cst_73 : f32 to vector<8x64xf32>
    %111 = arith.mulf %110, %107 : vector<8x64xf32>
    %112 = arith.mulf %111, %107 : vector<8x64xf32>
    %113 = arith.mulf %112, %107 : vector<8x64xf32>
    %114 = arith.addf %107, %113 : vector<8x64xf32>
    %cst_74 = arith.constant 0.797884583 : f32
    %115 = vector.broadcast %cst_74 : f32 to vector<8x64xf32>
    %116 = arith.mulf %115, %114 : vector<8x64xf32>
    %117 = math.tanh %116 : vector<8x64xf32>
    %cst_75 = arith.constant 1.000000e+00 : f32
    %118 = vector.broadcast %cst_75 : f32 to vector<8x64xf32>
    %119 = arith.addf %118, %117 : vector<8x64xf32>
    %120 = arith.mulf %109, %119 : vector<8x64xf32>
    %121 = arith.truncf %120 : vector<8x64xf32> to vector<8x64xbf16>
    %c0_76 = arith.constant 0 : index
    %c0_77 = arith.constant 0 : index
    %c0_78 = arith.constant 0 : index
    %122 = vector.load %arg12[%c0_76, %c0_77, %c0_78] : memref<1x64x32xbf16, #tpu.memory_space<vmem>>, vector<1x64x32xbf16>
    %123 = vector.shape_cast %122 : vector<1x64x32xbf16> to vector<64x32xbf16>
    %cst_79 = arith.constant dense<0.000000e+00> : vector<8x32xf32>
    %124 = tpu.matmul %121, %123, %cst_79 {dimension_numbers = #tpu.dot_dimension_numbers<[1], [0], [0], [1], [0, 0, 1, 1], [], []>} : vector<8x64xbf16>, vector<64x32xbf16>, vector<8x32xf32> -> vector<8x32xf32>
    %c0_80 = arith.constant 0 : index
    %c0_81 = arith.constant 0 : index
    %c0_82 = arith.constant 0 : index
    %125 = vector.load %arg13[%c0_80, %c0_81, %c0_82] : memref<1x1x32xf32, #tpu.memory_space<vmem>>, vector<1x1x32xf32>
    %126 = vector.shape_cast %125 : vector<1x1x32xf32> to vector<1x32xf32>
    %127 = vector.broadcast %126 : vector<1x32xf32> to vector<8x32xf32>
    %128 = arith.addf %124, %127 : vector<8x32xf32>
    %129 = arith.addf %128, %99 : vector<8x32xf32>
    %c0_83 = arith.constant 0 : index
    %c0_84 = arith.constant 0 : index
    %c0_85 = arith.constant 0 : index
    %130 = vector.load %arg14[%c0_83, %c0_84, %c0_85] : memref<1x1x32xf32, #tpu.memory_space<vmem>>, vector<1x1x32xf32>
    %131 = vector.shape_cast %130 : vector<1x1x32xf32> to vector<1x32xf32>
    %c0_86 = arith.constant 0 : index
    %c0_87 = arith.constant 0 : index
    %c0_88 = arith.constant 0 : index
    %132 = vector.load %arg15[%c0_86, %c0_87, %c0_88] : memref<1x1x32xf32, #tpu.memory_space<vmem>>, vector<1x1x32xf32>
    %133 = vector.shape_cast %132 : vector<1x1x32xf32> to vector<1x32xf32>
    %cst_89 = arith.constant dense<0.000000e+00> : vector<8xf32>
    %134 = vector.multi_reduction <add>, %129, %cst_89 [1] : vector<8x32xf32> to vector<8xf32>
    %135 = vector.shape_cast %134 : vector<8xf32> to vector<8x1xf32>
    %cst_90 = arith.constant 3.200000e+01 : f32
    %136 = vector.broadcast %cst_90 : f32 to vector<8x1xf32>
    %137 = arith.divf %135, %136 : vector<8x1xf32>
    %138 = vector.broadcast %137 : vector<8x1xf32> to vector<8x32xf32>
    %139 = arith.subf %129, %138 : vector<8x32xf32>
    %140 = arith.mulf %139, %139 : vector<8x32xf32>
    %cst_91 = arith.constant dense<0.000000e+00> : vector<8xf32>
    %141 = vector.multi_reduction <add>, %140, %cst_91 [1] : vector<8x32xf32> to vector<8xf32>
    %142 = vector.shape_cast %141 : vector<8xf32> to vector<8x1xf32>
    %cst_92 = arith.constant 3.200000e+01 : f32
    %143 = vector.broadcast %cst_92 : f32 to vector<8x1xf32>
    %144 = arith.divf %142, %143 : vector<8x1xf32>
    %145 = vector.broadcast %137 : vector<8x1xf32> to vector<8x32xf32>
    %146 = arith.subf %129, %145 : vector<8x32xf32>
    %cst_93 = arith.constant 9.99999996E-13 : f32
    %147 = vector.broadcast %cst_93 : f32 to vector<8x1xf32>
    %148 = arith.addf %144, %147 : vector<8x1xf32>
    %149 = math.rsqrt %148 : vector<8x1xf32>
    %150 = vector.broadcast %149 : vector<8x1xf32> to vector<8x32xf32>
    %151 = arith.mulf %146, %150 : vector<8x32xf32>
    %152 = vector.broadcast %131 : vector<1x32xf32> to vector<8x32xf32>
    %153 = arith.mulf %151, %152 : vector<8x32xf32>
    %154 = vector.broadcast %133 : vector<1x32xf32> to vector<8x32xf32>
    %155 = arith.addf %153, %154 : vector<8x32xf32>
    %c0_94 = arith.constant 0 : index
    %c0_95 = arith.constant 0 : index
    %156 = vector.load %arg17[%c0_94, %c0_95] : memref<8x32xf32, #tpu.memory_space<vmem>>, vector<8x32xf32>
    tpu.vector_store %arg17[%c0_94, %c0_95], %155 {strides = array<i32>} : memref<8x32xf32, #tpu.memory_space<vmem>>, vector<8x32xf32>,
    %157 = arith.truncf %155 : vector<8x32xf32> to vector<8x32xbf16>
    %c0_96 = arith.constant 0 : index
    %c0_97 = arith.constant 0 : index
    %c0_98 = arith.constant 0 : index
    %c0_99 = arith.constant 0 : index
    %158 = vector.load %arg16[%c0_96, %c0_97, %c0_98, %c0_99] : memref<1x1x8x32xbf16, #tpu.memory_space<vmem>>, vector<1x1x8x32xbf16>
    %159 = vector.shape_cast %158 : vector<1x1x8x32xbf16> to vector<8x32xbf16>
    %160 = vector.shape_cast %157 : vector<8x32xbf16> to vector<1x1x8x32xbf16>
    tpu.vector_store %arg16[%c0_96, %c0_97, %c0_98, %c0_99], %160 {strides = array<i32>} : memref<1x1x8x32xbf16, #tpu.memory_space<vmem>>, vector<1x1x8x32xbf16>,
    return
  }
  func.func @transform_0(%arg0: i32, %arg1: i32) -> (i32, i32, i32) {
    %c0_i32 = arith.constant 0 : i32
    %c0_i32_0 = arith.constant 0 : i32
    %c0_i32_1 = arith.constant 0 : i32
    return %arg0, %c0_i32, %c0_i32_0 : i32, i32, i32
  }
  func.func @transform_1(%arg0: i32, %arg1: i32) -> (i32, i32, i32) {
    %c0_i32 = arith.constant 0 : i32
    %c0_i32_0 = arith.constant 0 : i32
    %c0_i32_1 = arith.constant 0 : i32
    return %arg0, %c0_i32, %c0_i32_0 : i32, i32, i32
  }
  func.func @transform_2(%arg0: i32, %arg1: i32) -> (i32, i32, i32) {
    %c0_i32 = arith.constant 0 : i32
    %c0_i32_0 = arith.constant 0 : i32
    %c0_i32_1 = arith.constant 0 : i32
    return %arg1, %c0_i32, %c0_i32_0 : i32, i32, i32
  }
  func.func @transform_3(%arg0: i32, %arg1: i32) -> (i32, i32, i32) {
    %c0_i32 = arith.constant 0 : i32
    %c0_i32_0 = arith.constant 0 : i32
    %c0_i32_1 = arith.constant 0 : i32
    return %arg1, %c0_i32, %c0_i32_0 : i32, i32, i32
  }
  func.func @transform_4(%arg0: i32, %arg1: i32) -> (i32, i32, i32, i32) {
    %c0_i32 = arith.constant 0 : i32
    %c0_i32_0 = arith.constant 0 : i32
    %c0_i32_1 = arith.constant 0 : i32
    %c0_i32_2 = arith.constant 0 : i32
    return %arg1, %c0_i32, %c0_i32_0, %c0_i32_1 : i32, i32, i32, i32
  }
  func.func @transform_5(%arg0: i32, %arg1: i32) -> (i32, i32, i32) {
    %c0_i32 = arith.constant 0 : i32
    %c0_i32_0 = arith.constant 0 : i32
    %c0_i32_1 = arith.constant 0 : i32
    return %arg1, %c0_i32, %c0_i32_0 : i32, i32, i32
  }
  func.func @transform_6(%arg0: i32, %arg1: i32) -> (i32, i32, i32) {
    %c0_i32 = arith.constant 0 : i32
    %c0_i32_0 = arith.constant 0 : i32
    %c0_i32_1 = arith.constant 0 : i32
    return %arg1, %c0_i32, %c0_i32_0 : i32, i32, i32
  }
  func.func @transform_7(%arg0: i32, %arg1: i32) -> (i32, i32, i32) {
    %c0_i32 = arith.constant 0 : i32
    %c0_i32_0 = arith.constant 0 : i32
    %c0_i32_1 = arith.constant 0 : i32
    return %arg1, %c0_i32, %c0_i32_0 : i32, i32, i32
  }
  func.func @transform_8(%arg0: i32, %arg1: i32) -> (i32, i32, i32) {
    %c0_i32 = arith.constant 0 : i32
    %c0_i32_0 = arith.constant 0 : i32
    %c0_i32_1 = arith.constant 0 : i32
    return %arg1, %c0_i32, %c0_i32_0 : i32, i32, i32
  }
  func.func @transform_9(%arg0: i32, %arg1: i32) -> (i32, i32, i32) {
    %c0_i32 = arith.constant 0 : i32
    %c0_i32_0 = arith.constant 0 : i32
    %c0_i32_1 = arith.constant 0 : i32
    return %arg1, %c0_i32, %c0_i32_0 : i32, i32, i32
  }
  func.func @transform_10(%arg0: i32, %arg1: i32) -> (i32, i32, i32) {
    %c0_i32 = arith.constant 0 : i32
    %c0_i32_0 = arith.constant 0 : i32
    %c0_i32_1 = arith.constant 0 : i32
    return %arg1, %c0_i32, %c0_i32_0 : i32, i32, i32
  }
  func.func @transform_11(%arg0: i32, %arg1: i32) -> (i32, i32, i32) {
    %c0_i32 = arith.constant 0 : i32
    %c0_i32_0 = arith.constant 0 : i32
    %c0_i32_1 = arith.constant 0 : i32
    return %arg1, %c0_i32, %c0_i32_0 : i32, i32, i32
  }
  func.func @transform_12(%arg0: i32, %arg1: i32) -> (i32, i32, i32) {
    %c0_i32 = arith.constant 0 : i32
    %c0_i32_0 = arith.constant 0 : i32
    %c0_i32_1 = arith.constant 0 : i32
    return %arg1, %c0_i32, %c0_i32_0 : i32, i32, i32
  }
  func.func @transform_13(%arg0: i32, %arg1: i32) -> (i32, i32, i32) {
    %c0_i32 = arith.constant 0 : i32
    %c0_i32_0 = arith.constant 0 : i32
    %c0_i32_1 = arith.constant 0 : i32
    return %arg1, %c0_i32, %c0_i32_0 : i32, i32, i32
  }
  func.func @transform_14(%arg0: i32, %arg1: i32) -> (i32, i32, i32, i32) {
    %c0_i32 = arith.constant 0 : i32
    %c0_i32_0 = arith.constant 0 : i32
    %c0_i32_1 = arith.constant 0 : i32
    return %arg1, %arg0, %c0_i32, %c0_i32_0 : i32, i32, i32, i32
  }
}

</mosaic_0001>

<llo_original>
// kernel: tpu_custom_call.1
$region0: #{tpu_custom_call.1}
  #allocation0 [shape = 'u32[]', space=smem, size = 0x4, offset = 0x4, fixed_abs, tag = 'smem constant byte address 0x4 - core index']
  #allocation1 [shape = 'u32[144,128]{1,0:T(1,128)}', space=vmem, size = 0x12000, scoped, tag = 'internal scratch']
  #allocation2 [shape = 'f32[8,32]{1,0:T(8,128)}', space=vmem, size = 0x1000, scoped, tag = 'scratch operand']
  #allocation3 [shape = 'bf16[4,8,8]{2,1,0:T(8,128)(2,1)}', space=vmem, size = 0x2000, scoped, tag = 'scratch operand']
  #allocation4 [shape = 'bf16[4,8,8]{2,1,0:T(8,128)(2,1)}', space=vmem, size = 0x2000, scoped, tag = 'scratch operand']
  #allocation5 [shape = 'bf16[4,8,8]{2,1,0:T(8,128)(2,1)}', space=vmem, size = 0x2000, scoped, tag = 'scratch operand']
  #allocation6 [shape = 'f32[8,32]{1,0:T(8,128)}', space=vmem, size = 0x1000, scoped, tag = 'scratch operand']
  %s0 = inlined_call_operand.hbm [shape: bf16[2,8,32], index: 0, kind: input, shape index: {}]
  %s1 = inlined_call_operand.hbm [shape: f32[2,1,8], index: 1, kind: input, shape index: {}]
  %s2 = inlined_call_operand.hbm [shape: bf16[2,32,96], index: 2, kind: input, shape index: {}]
  %s3 = inlined_call_operand.hbm [shape: f32[2,1,96], index: 3, kind: input, shape index: {}]
  %s4 = inlined_call_operand.hbm [shape: bf16[2,4,8,32], index: 4, kind: input, shape index: {}]
  %s5 = inlined_call_operand.hbm [shape: f32[2,1,32], index: 5, kind: input, shape index: {}]
  %s6 = inlined_call_operand.hbm [shape: f32[2,1,32], index: 6, kind: input, shape index: {}]
  %s7 = inlined_call_operand.hbm [shape: f32[2,1,32], index: 7, kind: input, shape index: {}]
  %s8 = inlined_call_operand.hbm [shape: bf16[2,32,64], index: 8, kind: input, shape index: {}]
  %s9 = inlined_call_operand.hbm [shape: f32[2,1,64], index: 9, kind: input, shape index: {}]
  %s10 = inlined_call_operand.hbm [shape: bf16[2,64,32], index: 10, kind: input, shape index: {}]
  %s11 = inlined_call_operand.hbm [shape: f32[2,1,32], index: 11, kind: input, shape index: {}]
  %s12 = inlined_call_operand.hbm [shape: f32[2,1,32], index: 12, kind: input, shape index: {}]
  %s13 = inlined_call_operand.hbm [shape: f32[2,1,32], index: 13, kind: input, shape index: {}]
  %s14 = inlined_call_operand.hbm [shape: bf16[2,2,8,32], index: 14, kind: output, shape index: {}]
  %s15 = sld [smem:[#allocation0]]
  $region156: #{tpu_custom_call.1} parent=0
    _
  %s17 = ssub.s32 1, %s15
  %s18 = scalar_select 0, %s17, %s15
  $region1: #{tpu_custom_call.1} parent=0
    #allocation7 [shape = 'u8[4096]{0}', space=vmem, size = 0x1000, scoped, tag = 'input window, operand 0']
    #allocation8 [shape = 's32[2]{0}', space=sflag, size = 0x8, scoped, tag = 'scoped memory for tpu_custom_call.1']
    #allocation9 [shape = 's32[2]{0}', space=sflag, size = 0x8, scoped, tag = 'scoped memory for tpu_custom_call.1']
    #allocation10 [shape = 'u8[1024]{0}', space=vmem, size = 0x400, scoped, tag = 'input window, operand 1']
    #allocation11 [shape = 's32[2]{0}', space=sflag, size = 0x8, scoped, tag = 'scoped memory for tpu_custom_call.1']
    #allocation12 [shape = 'u8[16384]{0}', space=vmem, size = 0x4000, scoped, tag = 'input window, operand 2']
    #allocation13 [shape = 'u8[1024]{0}', space=vmem, size = 0x400, scoped, tag = 'input window, operand 3']
    #allocation14 [shape = 's32[2]{0}', space=sflag, size = 0x8, scoped, tag = 'scoped memory for tpu_custom_call.1']
    #allocation15 [shape = 'u8[16384]{0}', space=vmem, size = 0x4000, scoped, tag = 'input window, operand 4']
    #allocation16 [shape = 'u8[1024]{0}', space=vmem, size = 0x400, scoped, tag = 'input window, operand 5']
    #allocation17 [shape = 's32[2]{0}', space=sflag, size = 0x8, scoped, tag = 'scoped memory for tpu_custom_call.1']
    #allocation18 [shape = 'u8[1024]{0}', space=vmem, size = 0x400, scoped, tag = 'input window, operand 6']
    #allocation19 [shape = 'u8[1024]{0}', space=vmem, size = 0x400, scoped, tag = 'input window, operand 7']
    #allocation20 [shape = 's32[2]{0}', space=sflag, size = 0x8, scoped, tag = 'scoped memory for tpu_custom_call.1']
    #allocation21 [shape = 'u8[16384]{0}', space=vmem, size = 0x4000, scoped, tag = 'input window, operand 8']
    #allocation22 [shape = 'u8[1024]{0}', space=vmem, size = 0x400, scoped, tag = 'input window, operand 9']
    #allocation23 [shape = 's32[2]{0}', space=sflag, size = 0x8, scoped, tag = 'scoped memory for tpu_custom_call.1']
    #allocation24 [shape = 'u8[32768]{0}', space=vmem, size = 0x8000, scoped, tag = 'input window, operand 10']
    #allocation25 [shape = 'u8[1024]{0}', space=vmem, size = 0x400, scoped, tag = 'input window, operand 11']
    #allocation26 [shape = 's32[2]{0}', space=sflag, size = 0x8, scoped, tag = 'scoped memory for tpu_custom_call.1']
    #allocation27 [shape = 'u8[1024]{0}', space=vmem, size = 0x400, scoped, tag = 'input window, operand 12']
    #allocation28 [shape = 'u8[1024]{0}', space=vmem, size = 0x400, scoped, tag = 'input window, operand 13']
    #allocation29 [shape = 's32[2]{0}', space=sflag, size = 0x8, scoped, tag = 'scoped memory for tpu_custom_call.1']
    #allocation30 [shape = 'u8[4096]{0}', space=vmem, size = 0x1000, scoped, tag = 'output window, operand 0']
    %19 = vsyncpa [#allocation8], 0
    %s20 = scalar_lea.sflag [#allocation8], 1
    %21 = vsyncpa %s20, 0
    %22 = vsyncpa [#allocation11], 0
    %s23 = scalar_lea.sflag [#allocation11], 1
    %24 = vsyncpa %s23, 0
    %25 = vsyncpa [#allocation14], 0
    %s26 = scalar_lea.sflag [#allocation14], 1
    %27 = vsyncpa %s26, 0
    %28 = vsyncpa [#allocation17], 0
    %s29 = scalar_lea.sflag [#allocation17], 1
    %30 = vsyncpa %s29, 0
    %31 = vsyncpa [#allocation20], 0
    %s32 = scalar_lea.sflag [#allocation20], 1
    %33 = vsyncpa %s32, 0
    %34 = vsyncpa [#allocation23], 0
    %s35 = scalar_lea.sflag [#allocation23], 1
    %36 = vsyncpa %s35, 0
    %37 = vsyncpa [#allocation26], 0
    %s38 = scalar_lea.sflag [#allocation26], 1
    %39 = vsyncpa %s38, 0
    %40 = vsyncpa [#allocation29], 0
    %s41 = scalar_lea.sflag [#allocation29], 1
    %42 = vsyncpa %s41, 0
    %43 = vsyncpa [#allocation9], 0
    %s44 = scalar_lea.sflag [#allocation9], 1
    %45 = vsyncpa %s44, 0
    loop: start=0, step=1, limit=6
    $region2: #{tpu_custom_call.1} parent=1 // loop_pre_header
      _
    $region3: #{tpu_custom_call.1} parent=1 // loop_header
      %s47 = sphi 0, %s51
      %p48 = scmp.ge.s32.totalorder %s47, 6
      %s54 = sphi 0, %s66
      %s55 = sphi 0, %s62
      %s56 = sphi 0, %s54
      %s57 = sphi 0, %s55
      %s58 = sphi 0, %s56
      %s59 = sphi 0, %s57
      %s69 = sphi 0, %s71
      %s72 = sphi 0, %s69
      %s73 = sphi 0, %s72
      %s89 = sphi 0, %s73
      %s95 = sphi 0, %s97
      %s98 = sphi 0, %s95
      %s99 = sphi 0, %s98
      %s115 = sphi 0, %s99
      %s121 = sphi 0, %s123
      %s124 = sphi 0, %s121
      %s125 = sphi 0, %s124
      %s141 = sphi 0, %s125
      %s147 = sphi 0, %s149
      %s150 = sphi 0, %s147
      %s151 = sphi 0, %s150
      %s167 = sphi 0, %s151
      %s173 = sphi 0, %s175
      %s176 = sphi 0, %s173
      %s177 = sphi 0, %s176
      %s193 = sphi 0, %s177
      %s199 = sphi 0, %s201
      %s202 = sphi 0, %s199
      %s203 = sphi 0, %s202
      %s219 = sphi 0, %s203
      %s225 = sphi 0, %s227
      %s228 = sphi 0, %s225
      %s229 = sphi 0, %s228
      %s245 = sphi 0, %s229
      %s251 = sphi 0, %s253
      %s254 = sphi 0, %s251
      %s255 = sphi 0, %s254
      %s271 = sphi 0, %s255
      %s277 = sphi 0, %s279
      %s280 = sphi 0, %s277
      %s281 = sphi 0, %s280
      %s297 = sphi 0, %s281
      %s303 = sphi 0, %s305
      %s306 = sphi 0, %s303
      %s307 = sphi 0, %s306
      %s323 = sphi 0, %s307
      %s329 = sphi 0, %s331
      %s332 = sphi 0, %s329
      %s333 = sphi 0, %s332
      %s349 = sphi 0, %s333
      %s355 = sphi 0, %s357
      %s358 = sphi 0, %s355
      %s359 = sphi 0, %s358
      %s375 = sphi 0, %s359
      %s381 = sphi 0, %s383
      %s384 = sphi 0, %s381
      %s385 = sphi 0, %s384
      %s401 = sphi 0, %s385
      %s407 = sphi 0, %s409
      %s410 = sphi 0, %s407
      %s411 = sphi 0, %s410
      %s427 = sphi 0, %s411
      %s435 = sphi 0, %s437
      %s438 = sphi 0, %s435
      %s439 = sphi 0, %s438
      %s455 = sphi 0, %s439
    $region4: #{tpu_custom_call.1} parent=1 // loop_header_branch
      %50 = sbr.rel (%p48) target = $region8
    $region5: #{tpu_custom_call.1} parent=1 // loop_body
      %s52 = ssub.s32 %s47, 1
      %s53 = ssub.s32 %s47, 2
      %s60 = sadd.s32 1, %s55
      %p61 = scmp.ge.s32.totalorder %s60, 2
      %s62 = scalar_select %p61, 0, %s60
      %s63 = sadd.s32 1, %s54
      %s64 = scalar_select %p61, %s63, %s54
      %p65 = scmp.ge.s32.totalorder %s64, 2
      %s66 = scalar_select %p65, 0, %s64
      %s67 = ssub.s32 %s54, %s66
      %p68 = scmp.eq.s32.totalorder %s67, 0
      %s70 = sadd.s32 %s69, 1
      %s71 = scalar_select %p68, %s69, %s70
      %p74 = pneg %p68
      %p75 = scmp.eq.s32.totalorder %s47, 3
      %p76 = por %p74, %p75
      %p77 = scmp.ne.s32.totalorder %s69, %s72
      %p78 = scmp.eq.s32.totalorder %s47, 0
      %p79 = por %p77, %p78
      %p80 = scmp.ne.s32.totalorder %s69, %s72
      %p81 = scmp.eq.s32.totalorder %s52, 3
      %p82 = por %p80, %p81
      %p83 = scmp.ne.s32.totalorder %s72, %s73
      %p84 = scmp.eq.s32.totalorder %s52, 0
      %p85 = por %p83, %p84
      %p86 = scmp.ne.s32.totalorder %s72, %s73
      %p87 = scmp.eq.s32.totalorder %s53, 3
      %p88 = por %p86, %p87
      %p90 = scmp.ne.s32.totalorder %s73, %s89
      %p91 = scmp.eq.s32.totalorder %s53, 0
      %p92 = por %p90, %p91
      %s93 = ssub.s32 %s54, %s66
      %p94 = scmp.eq.s32.totalorder %s93, 0
      %s96 = sadd.s32 %s95, 1
      %s97 = scalar_select %p94, %s95, %s96
      %p100 = pneg %p94
      %p101 = scmp.eq.s32.totalorder %s47, 3
      %p102 = por %p100, %p101
      %p103 = scmp.ne.s32.totalorder %s95, %s98
      %p104 = scmp.eq.s32.totalorder %s47, 0
      %p105 = por %p103, %p104
      %p106 = scmp.ne.s32.totalorder %s95, %s98
      %p107 = scmp.eq.s32.totalorder %s52, 3
      %p108 = por %p106, %p107
      %p109 = scmp.ne.s32.totalorder %s98, %s99
      %p110 = scmp.eq.s32.totalorder %s52, 0
      %p111 = por %p109, %p110
      %p112 = scmp.ne.s32.totalorder %s98, %s99
      %p113 = scmp.eq.s32.totalorder %s53, 3
      %p114 = por %p112, %p113
      %p116 = scmp.ne.s32.totalorder %s99, %s115
      %p117 = scmp.eq.s32.totalorder %s53, 0
      %p118 = por %p116, %p117
      %s119 = ssub.s32 %s55, %s62
      %p120 = scmp.eq.s32.totalorder %s119, 0
      %s122 = sadd.s32 %s121, 1
      %s123 = scalar_select %p120, %s121, %s122
      %p126 = pneg %p120
      %p127 = scmp.eq.s32.totalorder %s47, 3
      %p128 = por %p126, %p127
      %p129 = scmp.ne.s32.totalorder %s121, %s124
      %p130 = scmp.eq.s32.totalorder %s47, 0
      %p131 = por %p129, %p130
      %p132 = scmp.ne.s32.totalorder %s121, %s124
      %p133 = scmp.eq.s32.totalorder %s52, 3
      %p134 = por %p132, %p133
      %p135 = scmp.ne.s32.totalorder %s124, %s125
      %p136 = scmp.eq.s32.totalorder %s52, 0
      %p137 = por %p135, %p136
      %p138 = scmp.ne.s32.totalorder %s124, %s125
      %p139 = scmp.eq.s32.totalorder %s53, 3
      %p140 = por %p138, %p139
      %p142 = scmp.ne.s32.totalorder %s125, %s141
      %p143 = scmp.eq.s32.totalorder %s53, 0
      %p144 = por %p142, %p143
      %s145 = ssub.s32 %s55, %s62
      %p146 = scmp.eq.s32.totalorder %s145, 0
      %s148 = sadd.s32 %s147, 1
      %s149 = scalar_select %p146, %s147, %s148
      %p152 = pneg %p146
      %p153 = scmp.eq.s32.totalorder %s47, 3
      %p154 = por %p152, %p153
      %p155 = scmp.ne.s32.totalorder %s147, %s150
      %p156 = scmp.eq.s32.totalorder %s47, 0
      %p157 = por %p155, %p156
      %p158 = scmp.ne.s32.totalorder %s147, %s150
      %p159 = scmp.eq.s32.totalorder %s52, 3
      %p160 = por %p158, %p159
      %p161 = scmp.ne.s32.totalorder %s150, %s151
      %p162 = scmp.eq.s32.totalorder %s52, 0
      %p163 = por %p161, %p162
      %p164 = scmp.ne.s32.totalorder %s150, %s151
      %p165 = scmp.eq.s32.totalorder %s53, 3
      %p166 = por %p164, %p165
      %p168 = scmp.ne.s32.totalorder %s151, %s167
      %p169 = scmp.eq.s32.totalorder %s53, 0
      %p170 = por %p168, %p169
      %s171 = ssub.s32 %s55, %s62
      %p172 = scmp.eq.s32.totalorder %s171, 0
      %s174 = sadd.s32 %s173, 1
      %s175 = scalar_select %p172, %s173, %s174
      %p178 = pneg %p172
      %p179 = scmp.eq.s32.totalorder %s47, 3
      %p180 = por %p178, %p179
      %p181 = scmp.ne.s32.totalorder %s173, %s176
      %p182 = scmp.eq.s32.totalorder %s47, 0
      %p183 = por %p181, %p182
      %p184 = scmp.ne.s32.totalorder %s173, %s176
      %p185 = scmp.eq.s32.totalorder %s52, 3
      %p186 = por %p184, %p185
      %p187 = scmp.ne.s32.totalorder %s176, %s177
      %p188 = scmp.eq.s32.totalorder %s52, 0
      %p189 = por %p187, %p188
      %p190 = scmp.ne.s32.totalorder %s176, %s177
      %p191 = scmp.eq.s32.totalorder %s53, 3
      %p192 = por %p190, %p191
      %p194 = scmp.ne.s32.totalorder %s177, %s193
      %p195 = scmp.eq.s32.totalorder %s53, 0
      %p196 = por %p194, %p195
      %s197 = ssub.s32 %s55, %s62
      %p198 = scmp.eq.s32.totalorder %s197, 0
      %s200 = sadd.s32 %s199, 1
      %s201 = scalar_select %p198, %s199, %s200
      %p204 = pneg %p198
      %p205 = scmp.eq.s32.totalorder %s47, 3
      %p206 = por %p204, %p205
      %p207 = scmp.ne.s32.totalorder %s199, %s202
      %p208 = scmp.eq.s32.totalorder %s47, 0
      %p209 = por %p207, %p208
      %p210 = scmp.ne.s32.totalorder %s199, %s202
      %p211 = scmp.eq.s32.totalorder %s52, 3
      %p212 = por %p210, %p211
      %p213 = scmp.ne.s32.totalorder %s202, %s203
      %p214 = scmp.eq.s32.totalorder %s52, 0
      %p215 = por %p213, %p214
      %p216 = scmp.ne.s32.totalorder %s202, %s203
      %p217 = scmp.eq.s32.totalorder %s53, 3
      %p218 = por %p216, %p217
      %p220 = scmp.ne.s32.totalorder %s203, %s219
      %p221 = scmp.eq.s32.totalorder %s53, 0
      %p222 = por %p220, %p221
      %s223 = ssub.s32 %s55, %s62
      %p224 = scmp.eq.s32.totalorder %s223, 0
      %s226 = sadd.s32 %s225, 1
      %s227 = scalar_select %p224, %s225, %s226
      %p230 = pneg %p224
      %p231 = scmp.eq.s32.totalorder %s47, 3
      %p232 = por %p230, %p231
      %p233 = scmp.ne.s32.totalorder %s225, %s228
      %p234 = scmp.eq.s32.totalorder %s47, 0
      %p235 = por %p233, %p234
      %p236 = scmp.ne.s32.totalorder %s225, %s228
      %p237 = scmp.eq.s32.totalorder %s52, 3
      %p238 = por %p236, %p237
      %p239 = scmp.ne.s32.totalorder %s228, %s229
      %p240 = scmp.eq.s32.totalorder %s52, 0
      %p241 = por %p239, %p240
      %p242 = scmp.ne.s32.totalorder %s228, %s229
      %p243 = scmp.eq.s32.totalorder %s53, 3
      %p244 = por %p242, %p243
      %p246 = scmp.ne.s32.totalorder %s229, %s245
      %p247 = scmp.eq.s32.totalorder %s53, 0
      %p248 = por %p246, %p247
      %s249 = ssub.s32 %s55, %s62
      %p250 = scmp.eq.s32.totalorder %s249, 0
      %s252 = sadd.s32 %s251, 1
      %s253 = scalar_select %p250, %s251, %s252
      %p256 = pneg %p250
      %p257 = scmp.eq.s32.totalorder %s47, 3
      %p258 = por %p256, %p257
      %p259 = scmp.ne.s32.totalorder %s251, %s254
      %p260 = scmp.eq.s32.totalorder %s47, 0
      %p261 = por %p259, %p260
      %p262 = scmp.ne.s32.totalorder %s251, %s254
      %p263 = scmp.eq.s32.totalorder %s52, 3
      %p264 = por %p262, %p263
      %p265 = scmp.ne.s32.totalorder %s254, %s255
      %p266 = scmp.eq.s32.totalorder %s52, 0
      %p267 = por %p265, %p266
      %p268 = scmp.ne.s32.totalorder %s254, %s255
      %p269 = scmp.eq.s32.totalorder %s53, 3
      %p270 = por %p268, %p269
      %p272 = scmp.ne.s32.totalorder %s255, %s271
      %p273 = scmp.eq.s32.totalorder %s53, 0
      %p274 = por %p272, %p273
      %s275 = ssub.s32 %s55, %s62
      %p276 = scmp.eq.s32.totalorder %s275, 0
      %s278 = sadd.s32 %s277, 1
      %s279 = scalar_select %p276, %s277, %s278
      %p282 = pneg %p276
      %p283 = scmp.eq.s32.totalorder %s47, 3
      %p284 = por %p282, %p283
      %p285 = scmp.ne.s32.totalorder %s277, %s280
      %p286 = scmp.eq.s32.totalorder %s47, 0
      %p287 = por %p285, %p286
      %p288 = scmp.ne.s32.totalorder %s277, %s280
      %p289 = scmp.eq.s32.totalorder %s52, 3
      %p290 = por %p288, %p289
      %p291 = scmp.ne.s32.totalorder %s280, %s281
      %p292 = scmp.eq.s32.totalorder %s52, 0
      %p293 = por %p291, %p292
      %p294 = scmp.ne.s32.totalorder %s280, %s281
      %p295 = scmp.eq.s32.totalorder %s53, 3
      %p296 = por %p294, %p295
      %p298 = scmp.ne.s32.totalorder %s281, %s297
      %p299 = scmp.eq.s32.totalorder %s53, 0
      %p300 = por %p298, %p299
      %s301 = ssub.s32 %s55, %s62
      %p302 = scmp.eq.s32.totalorder %s301, 0
      %s304 = sadd.s32 %s303, 1
      %s305 = scalar_select %p302, %s303, %s304
      %p308 = pneg %p302
      %p309 = scmp.eq.s32.totalorder %s47, 3
      %p310 = por %p308, %p309
      %p311 = scmp.ne.s32.totalorder %s303, %s306
      %p312 = scmp.eq.s32.totalorder %s47, 0
      %p313 = por %p311, %p312
      %p314 = scmp.ne.s32.totalorder %s303, %s306
      %p315 = scmp.eq.s32.totalorder %s52, 3
      %p316 = por %p314, %p315
      %p317 = scmp.ne.s32.totalorder %s306, %s307
      %p318 = scmp.eq.s32.totalorder %s52, 0
      %p319 = por %p317, %p318
      %p320 = scmp.ne.s32.totalorder %s306, %s307
      %p321 = scmp.eq.s32.totalorder %s53, 3
      %p322 = por %p320, %p321
      %p324 = scmp.ne.s32.totalorder %s307, %s323
      %p325 = scmp.eq.s32.totalorder %s53, 0
      %p326 = por %p324, %p325
      %s327 = ssub.s32 %s55, %s62
      %p328 = scmp.eq.s32.totalorder %s327, 0
      %s330 = sadd.s32 %s329, 1
      %s331 = scalar_select %p328, %s329, %s330
      %p334 = pneg %p328
      %p335 = scmp.eq.s32.totalorder %s47, 3
      %p336 = por %p334, %p335
      %p337 = scmp.ne.s32.totalorder %s329, %s332
      %p338 = scmp.eq.s32.totalorder %s47, 0
      %p339 = por %p337, %p338
      %p340 = scmp.ne.s32.totalorder %s329, %s332
      %p341 = scmp.eq.s32.totalorder %s52, 3
      %p342 = por %p340, %p341
      %p343 = scmp.ne.s32.totalorder %s332, %s333
      %p344 = scmp.eq.s32.totalorder %s52, 0
      %p345 = por %p343, %p344
      %p346 = scmp.ne.s32.totalorder %s332, %s333
      %p347 = scmp.eq.s32.totalorder %s53, 3
      %p348 = por %p346, %p347
      %p350 = scmp.ne.s32.totalorder %s333, %s349
      %p351 = scmp.eq.s32.totalorder %s53, 0
      %p352 = por %p350, %p351
      %s353 = ssub.s32 %s55, %s62
      %p354 = scmp.eq.s32.totalorder %s353, 0
      %s356 = sadd.s32 %s355, 1
      %s357 = scalar_select %p354, %s355, %s356
      %p360 = pneg %p354
      %p361 = scmp.eq.s32.totalorder %s47, 3
      %p362 = por %p360, %p361
      %p363 = scmp.ne.s32.totalorder %s355, %s358
      %p364 = scmp.eq.s32.totalorder %s47, 0
      %p365 = por %p363, %p364
      %p366 = scmp.ne.s32.totalorder %s355, %s358
      %p367 = scmp.eq.s32.totalorder %s52, 3
      %p368 = por %p366, %p367
      %p369 = scmp.ne.s32.totalorder %s358, %s359
      %p370 = scmp.eq.s32.totalorder %s52, 0
      %p371 = por %p369, %p370
      %p372 = scmp.ne.s32.totalorder %s358, %s359
      %p373 = scmp.eq.s32.totalorder %s53, 3
      %p374 = por %p372, %p373
      %p376 = scmp.ne.s32.totalorder %s359, %s375
      %p377 = scmp.eq.s32.totalorder %s53, 0
      %p378 = por %p376, %p377
      %s379 = ssub.s32 %s55, %s62
      %p380 = scmp.eq.s32.totalorder %s379, 0
      %s382 = sadd.s32 %s381, 1
      %s383 = scalar_select %p380, %s381, %s382
      %p386 = pneg %p380
      %p387 = scmp.eq.s32.totalorder %s47, 3
      %p388 = por %p386, %p387
      %p389 = scmp.ne.s32.totalorder %s381, %s384
      %p390 = scmp.eq.s32.totalorder %s47, 0
      %p391 = por %p389, %p390
      %p392 = scmp.ne.s32.totalorder %s381, %s384
      %p393 = scmp.eq.s32.totalorder %s52, 3
      %p394 = por %p392, %p393
      %p395 = scmp.ne.s32.totalorder %s384, %s385
      %p396 = scmp.eq.s32.totalorder %s52, 0
      %p397 = por %p395, %p396
      %p398 = scmp.ne.s32.totalorder %s384, %s385
      %p399 = scmp.eq.s32.totalorder %s53, 3
      %p400 = por %p398, %p399
      %p402 = scmp.ne.s32.totalorder %s385, %s401
      %p403 = scmp.eq.s32.totalorder %s53, 0
      %p404 = por %p402, %p403
      %s405 = ssub.s32 %s55, %s62
      %p406 = scmp.eq.s32.totalorder %s405, 0
      %s408 = sadd.s32 %s407, 1
      %s409 = scalar_select %p406, %s407, %s408
      %p412 = pneg %p406
      %p413 = scmp.eq.s32.totalorder %s47, 3
      %p414 = por %p412, %p413
      %p415 = scmp.ne.s32.totalorder %s407, %s410
      %p416 = scmp.eq.s32.totalorder %s47, 0
      %p417 = por %p415, %p416
      %p418 = scmp.ne.s32.totalorder %s407, %s410
      %p419 = scmp.eq.s32.totalorder %s52, 3
      %p420 = por %p418, %p419
      %p421 = scmp.ne.s32.totalorder %s410, %s411
      %p422 = scmp.eq.s32.totalorder %s52, 0
      %p423 = por %p421, %p422
      %p424 = scmp.ne.s32.totalorder %s410, %s411
      %p425 = scmp.eq.s32.totalorder %s53, 3
      %p426 = por %p424, %p425
      %p428 = scmp.ne.s32.totalorder %s411, %s427
      %p429 = scmp.eq.s32.totalorder %s53, 0
      %p430 = por %p428, %p429
      %s431 = ssub.s32 %s55, %s62
      %s432 = ssub.s32 %s54, %s66
      %s433 = sor.u32 %s431, %s432
      %p434 = scmp.eq.s32.totalorder %s433, 0
      %s436 = sadd.s32 %s435, 1
      %s437 = scalar_select %p434, %s435, %s436
      %p440 = pneg %p434
      %p441 = scmp.eq.s32.totalorder %s47, 3
      %p442 = por %p440, %p441
      %p443 = scmp.ne.s32.totalorder %s435, %s438
      %p444 = scmp.eq.s32.totalorder %s47, 0
      %p445 = por %p443, %p444
      %p446 = scmp.ne.s32.totalorder %s435, %s438
      %p447 = scmp.eq.s32.totalorder %s52, 3
      %p448 = por %p446, %p447
      %p449 = scmp.ne.s32.totalorder %s438, %s439
      %p450 = scmp.eq.s32.totalorder %s52, 0
      %p451 = por %p449, %p450
      %p452 = scmp.ne.s32.totalorder %s438, %s439
      %p453 = scmp.eq.s32.totalorder %s53, 3
      %p454 = por %p452, %p453
      %p456 = scmp.ne.s32.totalorder %s439, %s455
      %p457 = scmp.eq.s32.totalorder %s53, 0
      %p458 = por %p456, %p457
      %p459 = scmp.le.s32.totalorder 1, %s47
      %p460 = scmp.lt.s32.totalorder %s47, 5
      %p461 = pnand %p459, %p460
      %p462 = pneg %p461
      // Predicated region
      $region9: #{tpu_custom_call.1} parent=5 // pred_check
        _
      $region10: #{tpu_custom_call.1} parent=5 // pred_check_branch
        %464 = sbr.rel (%p461) target = $region12
      $region11: #{tpu_custom_call.1} parent=5 // pred_region
        %s465 = ssub.s32 %s47, 1
      $region12: #{tpu_custom_call.1} parent=5 // pred_fallthru
        _
      %p466 = scmp.lt.s32.totalorder %s47, 4
      // Predicated region
      $region13: #{tpu_custom_call.1} parent=5 // pred_check
        %p467 = pneg %p466
      $region14: #{tpu_custom_call.1} parent=5 // pred_check_branch
        %469 = sbr.rel (%p467) target = $region16
      $region15: #{tpu_custom_call.1} parent=5 // pred_region
        // Predicated region
        $region17: #{tpu_custom_call.1} parent=15 // pred_check
          %p470 = pneg %p79
        $region18: #{tpu_custom_call.1} parent=15 // pred_check_branch
          %472 = sbr.rel (%p470) target = $region20
        $region19: #{tpu_custom_call.1} parent=15 // pred_region
          %s473 = sand.u32 %s69, 1
          %s474 = scalar_lea.sflag [#allocation8], %s473
          %s475 = sand.u32 %s69, 1
          %s476 = smul.addr %s475, 4
          %s477 = scalar_lea.vmem [#allocation7], %s476
          %s479 = ssub.s32 64, 64
          %480 = vsyncadd %s474, %s479
          %s481 = smul.addr %s54, 64
          %s482 = scalar_lea.hbm %s0, %s481
          %s484 = sshll.u32 %s477, 4
          %s485 = int_to_ptr.vmem [resolvable:$true] %s484
          %487 = dma.hbm_to_vmem [thread:$0]  %s482, 64, %s485, %s474
        $region20: #{tpu_custom_call.1} parent=15 // pred_fallthru
          _
        // Predicated region
        $region21: #{tpu_custom_call.1} parent=15 // pred_check
          %p488 = pneg %p105
        $region22: #{tpu_custom_call.1} parent=15 // pred_check_branch
          %490 = sbr.rel (%p488) target = $region24
        $region23: #{tpu_custom_call.1} parent=15 // pred_region
          %s491 = sand.u32 %s47, 1
          %s492 = scalar_lea.sflag [#allocation11], %s491
          %s493 = sand.u32 %s95, 1
          %s494 = scalar_lea.vmem [#allocation10], %s493
          %s496 = ssub.s32 16, 16
          %497 = vsyncadd %s492, %s496
          %s498 = smul.addr %s54, 16
          %s499 = scalar_lea.hbm %s1, %s498
          %s501 = sshll.u32 %s494, 4
          %s502 = int_to_ptr.vmem [resolvable:$true] %s501
          %504 = dma.hbm_to_vmem [thread:$0]  %s499, 16, %s502, %s492
        $region24: #{tpu_custom_call.1} parent=15 // pred_fallthru
          _
        // Predicated region
        $region25: #{tpu_custom_call.1} parent=15 // pred_check
          %p505 = pneg %p131
        $region26: #{tpu_custom_call.1} parent=15 // pred_check_branch
          %507 = sbr.rel (%p505) target = $region28
        $region27: #{tpu_custom_call.1} parent=15 // pred_region
          %s508 = sand.u32 %s47, 1
          %s509 = scalar_lea.sflag [#allocation11], %s508
          %s510 = sand.u32 %s121, 1
          %s511 = smul.addr %s510, 16
          %s512 = scalar_lea.vmem [#allocation12], %s511
          %s514 = ssub.s32 256, 256
          %515 = vsyncadd %s509, %s514
          %s516 = smul.addr %s55, 4
          %s517 = smul.addr %s516, 64
          %s518 = scalar_lea.hbm %s2, %s517
          %s519 = sshll.u32 %s512, 4
          %s520 = int_to_ptr.vmem [resolvable:$true] %s519
          %525 = dma.hbm_to_vmem [thread:$0]  %s518, 256, %s520, %s509, 64, 64, 4
        $region28: #{tpu_custom_call.1} parent=15 // pred_fallthru
          _
        // Predicated region
        $region29: #{tpu_custom_call.1} parent=15 // pred_check
          %p526 = pneg %p157
        $region30: #{tpu_custom_call.1} parent=15 // pred_check_branch
          %528 = sbr.rel (%p526) target = $region32
        $region31: #{tpu_custom_call.1} parent=15 // pred_region
          %s529 = sand.u32 %s47, 1
          %s530 = scalar_lea.sflag [#allocation14], %s529
          %s531 = sand.u32 %s147, 1
          %s532 = scalar_lea.vmem [#allocation13], %s531
          %s534 = ssub.s32 16, 16
          %535 = vsyncadd %s530, %s534
          %s536 = smul.addr %s55, 16
          %s537 = scalar_lea.hbm %s3, %s536
          %s539 = sshll.u32 %s532, 4
          %s540 = int_to_ptr.vmem [resolvable:$true] %s539
          %542 = dma.hbm_to_vmem [thread:$0]  %s537, 16, %s540, %s530
        $region32: #{tpu_custom_call.1} parent=15 // pred_fallthru
          _
        // Predicated region
        $region33: #{tpu_custom_call.1} parent=15 // pred_check
          %p543 = pneg %p183
        $region34: #{tpu_custom_call.1} parent=15 // pred_check_branch
          %545 = sbr.rel (%p543) target = $region36
        $region35: #{tpu_custom_call.1} parent=15 // pred_region
          %s546 = sand.u32 %s47, 1
          %s547 = scalar_lea.sflag [#allocation14], %s546
          %s548 = sand.u32 %s173, 1
          %s549 = smul.addr %s548, 16
          %s550 = scalar_lea.vmem [#allocation15], %s549
          %s552 = ssub.s32 256, 256
          %553 = vsyncadd %s547, %s552
          %s554 = smul.addr %s55, 4
          %s555 = smul.addr %s554, 64
          %s556 = scalar_lea.hbm %s4, %s555
          %s557 = sshll.u32 %s550, 4
          %s558 = int_to_ptr.vmem [resolvable:$true] %s557
          %563 = dma.hbm_to_vmem [thread:$0]  %s556, 256, %s558, %s547, 64, 64, 4
        $region36: #{tpu_custom_call.1} parent=15 // pred_fallthru
          _
        // Predicated region
        $region37: #{tpu_custom_call.1} parent=15 // pred_check
          %p564 = pneg %p209
        $region38: #{tpu_custom_call.1} parent=15 // pred_check_branch
          %566 = sbr.rel (%p564) target = $region40
        $region39: #{tpu_custom_call.1} parent=15 // pred_region
          %s567 = sand.u32 %s47, 1
          %s568 = scalar_lea.sflag [#allocation17], %s567
          %s569 = sand.u32 %s199, 1
          %s570 = scalar_lea.vmem [#allocation16], %s569
          %s572 = ssub.s32 16, 16
          %573 = vsyncadd %s568, %s572
          %s574 = smul.addr %s55, 16
          %s575 = scalar_lea.hbm %s5, %s574
          %s577 = sshll.u32 %s570, 4
          %s578 = int_to_ptr.vmem [resolvable:$true] %s577
          %580 = dma.hbm_to_vmem [thread:$0]  %s575, 16, %s578, %s568
        $region40: #{tpu_custom_call.1} parent=15 // pred_fallthru
          _
        // Predicated region
        $region41: #{tpu_custom_call.1} parent=15 // pred_check
          %p581 = pneg %p235
        $region42: #{tpu_custom_call.1} parent=15 // pred_check_branch
          %583 = sbr.rel (%p581) target = $region44
        $region43: #{tpu_custom_call.1} parent=15 // pred_region
          %s584 = sand.u32 %s47, 1
          %s585 = scalar_lea.sflag [#allocation17], %s584
          %s586 = sand.u32 %s225, 1
          %s587 = scalar_lea.vmem [#allocation18], %s586
          %s589 = ssub.s32 16, 16
          %590 = vsyncadd %s585, %s589
          %s591 = smul.addr %s55, 16
          %s592 = scalar_lea.hbm %s6, %s591
          %s594 = sshll.u32 %s587, 4
          %s595 = int_to_ptr.vmem [resolvable:$true] %s594
          %597 = dma.hbm_to_vmem [thread:$0]  %s592, 16, %s595, %s585
        $region44: #{tpu_custom_call.1} parent=15 // pred_fallthru
          _
        // Predicated region
        $region45: #{tpu_custom_call.1} parent=15 // pred_check
          %p598 = pneg %p261
        $region46: #{tpu_custom_call.1} parent=15 // pred_check_branch
          %600 = sbr.rel (%p598) target = $region48
        $region47: #{tpu_custom_call.1} parent=15 // pred_region
          %s601 = sand.u32 %s47, 1
          %s602 = scalar_lea.sflag [#allocation20], %s601
          %s603 = sand.u32 %s251, 1
          %s604 = scalar_lea.vmem [#allocation19], %s603
          %s606 = ssub.s32 16, 16
          %607 = vsyncadd %s602, %s606
          %s608 = smul.addr %s55, 16
          %s609 = scalar_lea.hbm %s7, %s608
          %s611 = sshll.u32 %s604, 4
          %s612 = int_to_ptr.vmem [resolvable:$true] %s611
          %614 = dma.hbm_to_vmem [thread:$0]  %s609, 16, %s612, %s602
        $region48: #{tpu_custom_call.1} parent=15 // pred_fallthru
          _
        // Predicated region
        $region49: #{tpu_custom_call.1} parent=15 // pred_check
          %p615 = pneg %p287
        $region50: #{tpu_custom_call.1} parent=15 // pred_check_branch
          %617 = sbr.rel (%p615) target = $region52
        $region51: #{tpu_custom_call.1} parent=15 // pred_region
          %s618 = sand.u32 %s47, 1
          %s619 = scalar_lea.sflag [#allocation20], %s618
          %s620 = sand.u32 %s277, 1
          %s621 = smul.addr %s620, 16
          %s622 = scalar_lea.vmem [#allocation21], %s621
          %s624 = ssub.s32 256, 256
          %625 = vsyncadd %s619, %s624
          %s626 = smul.addr %s55, 4
          %s627 = smul.addr %s626, 64
          %s628 = scalar_lea.hbm %s8, %s627
          %s629 = sshll.u32 %s622, 4
          %s630 = int_to_ptr.vmem [resolvable:$true] %s629
          %635 = dma.hbm_to_vmem [thread:$0]  %s628, 256, %s630, %s619, 64, 64, 4
        $region52: #{tpu_custom_call.1} parent=15 // pred_fallthru
          _
        // Predicated region
        $region53: #{tpu_custom_call.1} parent=15 // pred_check
          %p636 = pneg %p313
        $region54: #{tpu_custom_call.1} parent=15 // pred_check_branch
          %638 = sbr.rel (%p636) target = $region56
        $region55: #{tpu_custom_call.1} parent=15 // pred_region
          %s639 = sand.u32 %s47, 1
          %s640 = scalar_lea.sflag [#allocation23], %s639
          %s641 = sand.u32 %s303, 1
          %s642 = scalar_lea.vmem [#allocation22], %s641
          %s644 = ssub.s32 16, 16
          %645 = vsyncadd %s640, %s644
          %s646 = smul.addr %s55, 16
          %s647 = scalar_lea.hbm %s9, %s646
          %s649 = sshll.u32 %s642, 4
          %s650 = int_to_ptr.vmem [resolvable:$true] %s649
          %652 = dma.hbm_to_vmem [thread:$0]  %s647, 16, %s650, %s640
        $region56: #{tpu_custom_call.1} parent=15 // pred_fallthru
          _
        // Predicated region
        $region57: #{tpu_custom_call.1} parent=15 // pred_check
          %p653 = pneg %p339
        $region58: #{tpu_custom_call.1} parent=15 // pred_check_branch
          %655 = sbr.rel (%p653) target = $region60
        $region59: #{tpu_custom_call.1} parent=15 // pred_region
          %s656 = sand.u32 %s47, 1
          %s657 = scalar_lea.sflag [#allocation23], %s656
          %s658 = sand.u32 %s329, 1
          %s659 = smul.addr %s658, 32
          %s660 = scalar_lea.vmem [#allocation24], %s659
          %s662 = ssub.s32 512, 512
          %663 = vsyncadd %s657, %s662
          %s664 = smul.addr %s55, 8
          %s665 = smul.addr %s664, 64
          %s666 = scalar_lea.hbm %s10, %s665
          %s667 = sshll.u32 %s660, 4
          %s668 = int_to_ptr.vmem [resolvable:$true] %s667
          %673 = dma.hbm_to_vmem [thread:$0]  %s666, 512, %s668, %s657, 64, 64, 4
        $region60: #{tpu_custom_call.1} parent=15 // pred_fallthru
          _
        // Predicated region
        $region61: #{tpu_custom_call.1} parent=15 // pred_check
          %p674 = pneg %p365
        $region62: #{tpu_custom_call.1} parent=15 // pred_check_branch
          %676 = sbr.rel (%p674) target = $region64
        $region63: #{tpu_custom_call.1} parent=15 // pred_region
          %s677 = sand.u32 %s47, 1
          %s678 = scalar_lea.sflag [#allocation26], %s677
          %s679 = sand.u32 %s355, 1
          %s680 = scalar_lea.vmem [#allocation25], %s679
          %s682 = ssub.s32 16, 16
          %683 = vsyncadd %s678, %s682
          %s684 = smul.addr %s55, 16
          %s685 = scalar_lea.hbm %s11, %s684
          %s687 = sshll.u32 %s680, 4
          %s688 = int_to_ptr.vmem [resolvable:$true] %s687
          %690 = dma.hbm_to_vmem [thread:$0]  %s685, 16, %s688, %s678
        $region64: #{tpu_custom_call.1} parent=15 // pred_fallthru
          _
        // Predicated region
        $region65: #{tpu_custom_call.1} parent=15 // pred_check
          %p691 = pneg %p391
        $region66: #{tpu_custom_call.1} parent=15 // pred_check_branch
          %693 = sbr.rel (%p691) target = $region68
        $region67: #{tpu_custom_call.1} parent=15 // pred_region
          %s694 = sand.u32 %s47, 1
          %s695 = scalar_lea.sflag [#allocation26], %s694
          %s696 = sand.u32 %s381, 1
          %s697 = scalar_lea.vmem [#allocation27], %s696
          %s699 = ssub.s32 16, 16
          %700 = vsyncadd %s695, %s699
          %s701 = smul.addr %s55, 16
          %s702 = scalar_lea.hbm %s12, %s701
          %s704 = sshll.u32 %s697, 4
          %s705 = int_to_ptr.vmem [resolvable:$true] %s704
          %707 = dma.hbm_to_vmem [thread:$0]  %s702, 16, %s705, %s695
        $region68: #{tpu_custom_call.1} parent=15 // pred_fallthru
          _
        // Predicated region
        $region69: #{tpu_custom_call.1} parent=15 // pred_check
          %p708 = pneg %p417
        $region70: #{tpu_custom_call.1} parent=15 // pred_check_branch
          %710 = sbr.rel (%p708) target = $region72
        $region71: #{tpu_custom_call.1} parent=15 // pred_region
          %s711 = sand.u32 %s407, 1
          %s712 = scalar_lea.sflag [#allocation29], %s711
          %s713 = sand.u32 %s407, 1
          %s714 = scalar_lea.vmem [#allocation28], %s713
          %s716 = ssub.s32 16, 16
          %717 = vsyncadd %s712, %s716
          %s718 = smul.addr %s55, 16
          %s719 = scalar_lea.hbm %s13, %s718
          %s721 = sshll.u32 %s714, 4
          %s722 = int_to_ptr.vmem [resolvable:$true] %s721
          %724 = dma.hbm_to_vmem [thread:$0]  %s719, 16, %s722, %s712
        $region72: #{tpu_custom_call.1} parent=15 // pred_fallthru
          _
      $region16: #{tpu_custom_call.1} parent=5 // pred_fallthru
        _
      %p725 = scmp.le.s32.totalorder 1, %s47
      %p726 = scmp.lt.s32.totalorder %s47, 5
      %p727 = pnand %p725, %p726
      %p728 = pneg %p727
      // Predicated region
      $region73: #{tpu_custom_call.1} parent=5 // pred_check
        _
      $region74: #{tpu_custom_call.1} parent=5 // pred_check_branch
        %730 = sbr.rel (%p727) target = $region76
      $region75: #{tpu_custom_call.1} parent=5 // pred_region
        %s731 = ssub.s32 %s47, 1
        %s732 = sand.u32 %s72, 1
        %s733 = scalar_lea.sflag [#allocation8], %s732
        %s734 = sand.u32 %s72, 1
        %s735 = smul.addr %s734, 4
        %s736 = scalar_lea.vmem [#allocation7], %s735
        // Predicated region
        $region77: #{tpu_custom_call.1} parent=75 // pred_check
          %p737 = pneg %p85
        $region78: #{tpu_custom_call.1} parent=75 // pred_check_branch
          %739 = sbr.rel (%p737) target = $region80
        $region79: #{tpu_custom_call.1} parent=75 // pred_region
          %740 = dma.done %s733, 64
        $region80: #{tpu_custom_call.1} parent=75 // pred_fallthru
          _
        %s741 = sand.u32 %s52, 1
        %s742 = scalar_lea.sflag [#allocation11], %s741
        %s743 = sand.u32 %s98, 1
        %s744 = scalar_lea.vmem [#allocation10], %s743
        // Predicated region
        $region81: #{tpu_custom_call.1} parent=75 // pred_check
          %p745 = pneg %p111
        $region82: #{tpu_custom_call.1} parent=75 // pred_check_branch
          %747 = sbr.rel (%p745) target = $region84
        $region83: #{tpu_custom_call.1} parent=75 // pred_region
          %748 = dma.done %s742, 16
        $region84: #{tpu_custom_call.1} parent=75 // pred_fallthru
          _
        %s749 = sand.u32 %s52, 1
        %s750 = scalar_lea.sflag [#allocation11], %s749
        %s751 = sand.u32 %s124, 1
        %s752 = smul.addr %s751, 16
        %s753 = scalar_lea.vmem [#allocation12], %s752
        // Predicated region
        $region85: #{tpu_custom_call.1} parent=75 // pred_check
          %p754 = pneg %p137
        $region86: #{tpu_custom_call.1} parent=75 // pred_check_branch
          %756 = sbr.rel (%p754) target = $region88
        $region87: #{tpu_custom_call.1} parent=75 // pred_region
          %757 = dma.done %s750, 256
        $region88: #{tpu_custom_call.1} parent=75 // pred_fallthru
          _
        %s758 = sand.u32 %s52, 1
        %s759 = scalar_lea.sflag [#allocation14], %s758
        %s760 = sand.u32 %s150, 1
        %s761 = scalar_lea.vmem [#allocation13], %s760
        // Predicated region
        $region89: #{tpu_custom_call.1} parent=75 // pred_check
          %p762 = pneg %p163
        $region90: #{tpu_custom_call.1} parent=75 // pred_check_branch
          %764 = sbr.rel (%p762) target = $region92
        $region91: #{tpu_custom_call.1} parent=75 // pred_region
          %765 = dma.done %s759, 16
        $region92: #{tpu_custom_call.1} parent=75 // pred_fallthru
          _
        %s766 = sand.u32 %s52, 1
        %s767 = scalar_lea.sflag [#allocation14], %s766
        %s768 = sand.u32 %s176, 1
        %s769 = smul.addr %s768, 16
        %s770 = scalar_lea.vmem [#allocation15], %s769
        // Predicated region
        $region93: #{tpu_custom_call.1} parent=75 // pred_check
          %p771 = pneg %p189
        $region94: #{tpu_custom_call.1} parent=75 // pred_check_branch
          %773 = sbr.rel (%p771) target = $region96
        $region95: #{tpu_custom_call.1} parent=75 // pred_region
          %774 = dma.done %s767, 256
        $region96: #{tpu_custom_call.1} parent=75 // pred_fallthru
          _
        %s775 = sand.u32 %s52, 1
        %s776 = scalar_lea.sflag [#allocation17], %s775
        %s777 = sand.u32 %s202, 1
        %s778 = scalar_lea.vmem [#allocation16], %s777
        // Predicated region
        $region97: #{tpu_custom_call.1} parent=75 // pred_check
          %p779 = pneg %p215
        $region98: #{tpu_custom_call.1} parent=75 // pred_check_branch
          %781 = sbr.rel (%p779) target = $region100
        $region99: #{tpu_custom_call.1} parent=75 // pred_region
          %782 = dma.done %s776, 16
        $region100: #{tpu_custom_call.1} parent=75 // pred_fallthru
          _
        %s783 = sand.u32 %s52, 1
        %s784 = scalar_lea.sflag [#allocation17], %s783
        %s785 = sand.u32 %s228, 1
        %s786 = scalar_lea.vmem [#allocation18], %s785
        // Predicated region
        $region101: #{tpu_custom_call.1} parent=75 // pred_check
          %p787 = pneg %p241
        $region102: #{tpu_custom_call.1} parent=75 // pred_check_branch
          %789 = sbr.rel (%p787) target = $region104
        $region103: #{tpu_custom_call.1} parent=75 // pred_region
          %790 = dma.done %s784, 16
        $region104: #{tpu_custom_call.1} parent=75 // pred_fallthru
          _
        %s791 = sand.u32 %s52, 1
        %s792 = scalar_lea.sflag [#allocation20], %s791
        %s793 = sand.u32 %s254, 1
        %s794 = scalar_lea.vmem [#allocation19], %s793
        // Predicated region
        $region105: #{tpu_custom_call.1} parent=75 // pred_check
          %p795 = pneg %p267
        $region106: #{tpu_custom_call.1} parent=75 // pred_check_branch
          %797 = sbr.rel (%p795) target = $region108
        $region107: #{tpu_custom_call.1} parent=75 // pred_region
          %798 = dma.done %s792, 16
        $region108: #{tpu_custom_call.1} parent=75 // pred_fallthru
          _
        %s799 = sand.u32 %s52, 1
        %s800 = scalar_lea.sflag [#allocation20], %s799
        %s801 = sand.u32 %s280, 1
        %s802 = smul.addr %s801, 16
        %s803 = scalar_lea.vmem [#allocation21], %s802
        // Predicated region
        $region109: #{tpu_custom_call.1} parent=75 // pred_check
          %p804 = pneg %p293
        $region110: #{tpu_custom_call.1} parent=75 // pred_check_branch
          %806 = sbr.rel (%p804) target = $region112
        $region111: #{tpu_custom_call.1} parent=75 // pred_region
          %807 = dma.done %s800, 256
        $region112: #{tpu_custom_call.1} parent=75 // pred_fallthru
          _
        %s808 = sand.u32 %s52, 1
        %s809 = scalar_lea.sflag [#allocation23], %s808
        %s810 = sand.u32 %s306, 1
        %s811 = scalar_lea.vmem [#allocation22], %s810
        // Predicated region
        $region113: #{tpu_custom_call.1} parent=75 // pred_check
          %p812 = pneg %p319
        $region114: #{tpu_custom_call.1} parent=75 // pred_check_branch
          %814 = sbr.rel (%p812) target = $region116
        $region115: #{tpu_custom_call.1} parent=75 // pred_region
          %815 = dma.done %s809, 16
        $region116: #{tpu_custom_call.1} parent=75 // pred_fallthru
          _
        %s816 = sand.u32 %s52, 1
        %s817 = scalar_lea.sflag [#allocation23], %s816
        %s818 = sand.u32 %s332, 1
        %s819 = smul.addr %s818, 32
        %s820 = scalar_lea.vmem [#allocation24], %s819
        // Predicated region
        $region117: #{tpu_custom_call.1} parent=75 // pred_check
          %p821 = pneg %p345
        $region118: #{tpu_custom_call.1} parent=75 // pred_check_branch
          %823 = sbr.rel (%p821) target = $region120
        $region119: #{tpu_custom_call.1} parent=75 // pred_region
          %824 = dma.done %s817, 512
        $region120: #{tpu_custom_call.1} parent=75 // pred_fallthru
          _
        %s825 = sand.u32 %s52, 1
        %s826 = scalar_lea.sflag [#allocation26], %s825
        %s827 = sand.u32 %s358, 1
        %s828 = scalar_lea.vmem [#allocation25], %s827
        // Predicated region
        $region121: #{tpu_custom_call.1} parent=75 // pred_check
          %p829 = pneg %p371
        $region122: #{tpu_custom_call.1} parent=75 // pred_check_branch
          %831 = sbr.rel (%p829) target = $region124
        $region123: #{tpu_custom_call.1} parent=75 // pred_region
          %832 = dma.done %s826, 16
        $region124: #{tpu_custom_call.1} parent=75 // pred_fallthru
          _
        %s833 = sand.u32 %s52, 1
        %s834 = scalar_lea.sflag [#allocation26], %s833
        %s835 = sand.u32 %s384, 1
        %s836 = scalar_lea.vmem [#allocation27], %s835
        // Predicated region
        $region125: #{tpu_custom_call.1} parent=75 // pred_check
          %p837 = pneg %p397
        $region126: #{tpu_custom_call.1} parent=75 // pred_check_branch
          %839 = sbr.rel (%p837) target = $region128
        $region127: #{tpu_custom_call.1} parent=75 // pred_region
          %840 = dma.done %s834, 16
        $region128: #{tpu_custom_call.1} parent=75 // pred_fallthru
          _
        %s841 = sand.u32 %s410, 1
        %s842 = scalar_lea.sflag [#allocation29], %s841
        %s843 = sand.u32 %s410, 1
        %s844 = scalar_lea.vmem [#allocation28], %s843
        // Predicated region
        $region129: #{tpu_custom_call.1} parent=75 // pred_check
          %p845 = pneg %p423
        $region130: #{tpu_custom_call.1} parent=75 // pred_check_branch
          %847 = sbr.rel (%p845) target = $region132
        $region131: #{tpu_custom_call.1} parent=75 // pred_region
          %848 = dma.done %s842, 16
        $region132: #{tpu_custom_call.1} parent=75 // pred_fallthru
          _
        %s849 = sand.u32 %s72, 1
        %s850 = scalar_lea.sflag [#allocation8], %s849
        %s851 = sand.u32 %s72, 1
        %s852 = smul.addr %s851, 4
        %s853 = scalar_lea.vmem [#allocation7], %s852
        %p854 = pneg %p85
        %p855 = pneg %p82
        %s856 = sand.u32 %s52, 1
        %s857 = scalar_lea.sflag [#allocation11], %s856
        %s858 = sand.u32 %s98, 1
        %s859 = scalar_lea.vmem [#allocation10], %s858
        %p860 = pneg %p111
        %p861 = pneg %p108
        %s862 = sand.u32 %s52, 1
        %s863 = scalar_lea.sflag [#allocation11], %s862
        %s864 = sand.u32 %s124, 1
        %s865 = smul.addr %s864, 16
        %s866 = scalar_lea.vmem [#allocation12], %s865
        %p867 = pneg %p137
        %p868 = pneg %p134
        %s869 = sand.u32 %s52, 1
        %s870 = scalar_lea.sflag [#allocation14], %s869
        %s871 = sand.u32 %s150, 1
        %s872 = scalar_lea.vmem [#allocation13], %s871
        %p873 = pneg %p163
        %p874 = pneg %p160
        %s875 = sand.u32 %s52, 1
        %s876 = scalar_lea.sflag [#allocation14], %s875
        %s877 = sand.u32 %s176, 1
        %s878 = smul.addr %s877, 16
        %s879 = scalar_lea.vmem [#allocation15], %s878
        %p880 = pneg %p189
        %p881 = pneg %p186
        %s882 = sand.u32 %s52, 1
        %s883 = scalar_lea.sflag [#allocation17], %s882
        %s884 = sand.u32 %s202, 1
        %s885 = scalar_lea.vmem [#allocation16], %s884
        %p886 = pneg %p215
        %p887 = pneg %p212
        %s888 = sand.u32 %s52, 1
        %s889 = scalar_lea.sflag [#allocation17], %s888
        %s890 = sand.u32 %s228, 1
        %s891 = scalar_lea.vmem [#allocation18], %s890
        %p892 = pneg %p241
        %p893 = pneg %p238
        %s894 = sand.u32 %s52, 1
        %s895 = scalar_lea.sflag [#allocation20], %s894
        %s896 = sand.u32 %s254, 1
        %s897 = scalar_lea.vmem [#allocation19], %s896
        %p898 = pneg %p267
        %p899 = pneg %p264
        %s900 = sand.u32 %s52, 1
        %s901 = scalar_lea.sflag [#allocation20], %s900
        %s902 = sand.u32 %s280, 1
        %s903 = smul.addr %s902, 16
        %s904 = scalar_lea.vmem [#allocation21], %s903
        %p905 = pneg %p293
        %p906 = pneg %p290
        %s907 = sand.u32 %s52, 1
        %s908 = scalar_lea.sflag [#allocation23], %s907
        %s909 = sand.u32 %s306, 1
        %s910 = scalar_lea.vmem [#allocation22], %s909
        %p911 = pneg %p319
        %p912 = pneg %p316
        %s913 = sand.u32 %s52, 1
        %s914 = scalar_lea.sflag [#allocation23], %s913
        %s915 = sand.u32 %s332, 1
        %s916 = smul.addr %s915, 32
        %s917 = scalar_lea.vmem [#allocation24], %s916
        %p918 = pneg %p345
        %p919 = pneg %p342
        %s920 = sand.u32 %s52, 1
        %s921 = scalar_lea.sflag [#allocation26], %s920
        %s922 = sand.u32 %s358, 1
        %s923 = scalar_lea.vmem [#allocation25], %s922
        %p924 = pneg %p371
        %p925 = pneg %p368
        %s926 = sand.u32 %s52, 1
        %s927 = scalar_lea.sflag [#allocation26], %s926
        %s928 = sand.u32 %s384, 1
        %s929 = scalar_lea.vmem [#allocation27], %s928
        %p930 = pneg %p397
        %p931 = pneg %p394
        %s932 = sand.u32 %s410, 1
        %s933 = scalar_lea.sflag [#allocation29], %s932
        %s934 = sand.u32 %s410, 1
        %s935 = scalar_lea.vmem [#allocation28], %s934
        %p936 = pneg %p423
        %p937 = pneg %p420
        %p938 = pneg %p451
        %p939 = pneg %p448
        %s940 = sand.u32 %s438, 1
        %s941 = scalar_lea.sflag [#allocation9], %s940
        %s942 = sand.u32 %s438, 1
        %s943 = smul.addr %s942, 4
        %s944 = scalar_lea.vmem [#allocation30], %s943
        %p946 = scmp.eq.s32.totalorder %s57, 0
        // Predicated region
        $region133: #{tpu_custom_call.1} parent=75 // pred_check
          %p947 = pneg %p946
        $region134: #{tpu_custom_call.1} parent=75 // pred_check_branch
          %949 = sbr.rel (%p947) target = $region136
        $region135: #{tpu_custom_call.1} parent=75 // pred_region
          %v950 = vld [vmem:[%s736] sm:$0xf]
          %v951 = vunpack.c.l.bf16 %v950
          %vm952 = vcmask 261120
          %953 = vst.msk [vmem:[#allocation2] sm:$0xff] %vm952, %v951
        $region136: #{tpu_custom_call.1} parent=75 // pred_fallthru
          _
        %v954 = vld [vmem:[#allocation2] sm:$0xff]
        %v955 = vld [vmem:[%s744] sm:$0x1]
        %v957 = vlaneseq
        %v958 = vshrl.u32 %v957, 7
        %v959 = vsub.s32 0, %v958
        %v960 = vrot.slane %v955, %v959
        %v962 = vpack.c.bf16 %v954, %v954
        %v963 = vld [vmem:[%s753] sm:$0xf]
        %v964 = vld [vmem:[%s753 + $0x4] sm:$0xf]
        %v965 = vld [vmem:[%s753 + $0x8] sm:$0xf]
        %v966 = vld [vmem:[%s753 + $0xc] sm:$0xf]
        %v967 = vld [vmem:[%s761] sm:$0x1]
        %v969 = vlaneseq
        %v970 = vshrl.u32 %v969, 7
        %v971 = vsub.s32 0, %v970
        %v972 = vrot.slane %v967, %v971
        %v978 = vunpack.c.l.b16 %v963
        %v979 = vunpack.c.l.b16 %v964
        %v980 = vunpack.c.l.b16 %v965
        %v981 = vunpack.c.l.b16 %v966
        %v982 = vpack.c.b16 %v979, %v978
        %v983 = vpack.c.b16 %v981, %v980
        %vm986 = vcmask 261120
        %v988 = vsel %vm986, %v962, 0
        %990 = vmatprep.subr.bf16.mxu0 0
        %991 = vmatpush1.bf16.msra.mxu0 %v982
        %992 = vmatprep.subr.bf16.mxu0 0
        %993 = vmatpush1.bf16.msra.mxu0 %v983
        %994 = vmatprep.subr.bf16.mxu0 0
        %995 = vmatpush1.bf16.msra.mxu0 0
        %996 = vmatprep.subr.bf16.mxu0 0
        %997 = vmatpush1.bf16.msra.mxu0 0
        %998 = vmatprep.subr.bf16.mxu0 0
        %999 = vmatpush1.bf16.msra.mxu0 0
        %1000 = vmatprep.subr.bf16.mxu0 0
        %1001 = vmatpush1.bf16.msra.mxu0 0
        %1002 = vmatprep.subr.bf16.mxu0 0
        %1003 = vmatpush1.bf16.msra.mxu0 0
        %1004 = vmatprep.subr.bf16.mxu0 0
        %1005 = vmatpush1.bf16.msra.mxu0 0
        %1006 = vmatprep.subr.bf16.mxu0 0
        %1007 = vmatpush1.bf16.msra.mxu0 0
        %1008 = vmatprep.subr.bf16.mxu0 0
        %1009 = vmatpush1.bf16.msra.mxu0 0
        %1010 = vmatprep.subr.bf16.mxu0 0
        %1011 = vmatpush1.bf16.msra.mxu0 0
        %1012 = vmatprep.subr.bf16.mxu0 0
        %1013 = vmatpush1.bf16.msra.mxu0 0
        %1014 = vmatprep.subr.bf16.mxu0 0
        %1015 = vmatpush1.bf16.msra.mxu0 0
        %1016 = vmatprep.subr.bf16.mxu0 0
        %1017 = vmatpush1.bf16.msra.mxu0 0
        %1018 = vmatprep.subr.bf16.mxu0 0
        %1019 = vmatpush1.bf16.msra.mxu0 0
        %1020 = vmatprep.subr.bf16.mxu0 0
        %1021 = vmatpush1.bf16.msra.mxu0 0
        %1022 = vmatprep.mubr.bf16.mxu0 0
        %1023 = vmatmul.mubr.bf16.gmra.mrb[0].mxu0 %v988
        %v1024 = vpop.f32.mrb[0].mxu0
        %v1025 = vadd.f32 %v972, %v1024
        %v1026 = vpop.f32.mrb[0].mxu0
        %v1027 = vpop.f32.mrb[0].mxu0
        %v1028 = vpop.f32.mrb[0].mxu0
        %1029 = vdwg.mxu0
        %v1030 = vpack.c.bf16 %v1025, %v1025
        %vm1031 = vcmask 60416
        %1032 = vst.msk [vmem:[#allocation3] sm:$0xf] %vm1031, %v1030
        %v1034 = vunpack.c.l.b16 %v1030
        %v1035 = vpack.c.b16 %v1034, %v1034
        %1036 = vrot.lane.b32.xlu0 %v1035, 96
        %v1037 = vpop.permute.xlu0 %1036
        %1039 = vst.msk [vmem:[#allocation4] sm:$0xf] %vm1031, %v1037
        %1040 = vrot.lane.b32.xlu0 %v1035, 64
        %v1041 = vpop.permute.xlu0 %1040
        %1043 = vst.msk [vmem:[#allocation5] sm:$0xf] %vm1031, %v1041
        %1044 = vrot.lane.b32.xlu0 %v1035, 120
        %v1045 = vpop.permute.xlu0 %1044
        %s1047 = scalar_lea.vmem [#allocation3], 4
        %1048 = vst.msk [vmem:[%s1047] sm:$0xf] %vm1031, %v1045
        %1049 = vrot.lane.b32.xlu0 %v1035, 88
        %v1050 = vpop.permute.xlu0 %1049
        %s1052 = scalar_lea.vmem [#allocation4], 4
        %1053 = vst.msk [vmem:[%s1052] sm:$0xf] %vm1031, %v1050
        %1054 = vrot.lane.b32.xlu0 %v1035, 56
        %v1055 = vpop.permute.xlu0 %1054
        %s1057 = scalar_lea.vmem [#allocation5], 4
        %1058 = vst.msk [vmem:[%s1057] sm:$0xf] %vm1031, %v1055
        %1059 = vrot.lane.b32.xlu0 %v1035, 112
        %v1060 = vpop.permute.xlu0 %1059
        %s1062 = scalar_lea.vmem [#allocation3], 8
        %1063 = vst.msk [vmem:[%s1062] sm:$0xf] %vm1031, %v1060
        %1064 = vrot.lane.b32.xlu0 %v1035, 80
        %v1065 = vpop.permute.xlu0 %1064
        %s1067 = scalar_lea.vmem [#allocation4], 8
        %1068 = vst.msk [vmem:[%s1067] sm:$0xf] %vm1031, %v1065
        %1069 = vrot.lane.b32.xlu0 %v1035, 48
        %v1070 = vpop.permute.xlu0 %1069
        %s1072 = scalar_lea.vmem [#allocation5], 8
        %1073 = vst.msk [vmem:[%s1072] sm:$0xf] %vm1031, %v1070
        %1074 = vrot.lane.b32.xlu0 %v1035, 104
        %v1075 = vpop.permute.xlu0 %1074
        %s1077 = scalar_lea.vmem [#allocation3], 12
        %1078 = vst.msk [vmem:[%s1077] sm:$0xf] %vm1031, %v1075
        %1079 = vrot.lane.b32.xlu0 %v1035, 72
        %v1080 = vpop.permute.xlu0 %1079
        %s1082 = scalar_lea.vmem [#allocation4], 12
        %1083 = vst.msk [vmem:[%s1082] sm:$0xf] %vm1031, %v1080
        %1084 = vrot.lane.b32.xlu0 %v1035, 40
        %v1085 = vpop.permute.xlu0 %1084
        %s1087 = scalar_lea.vmem [#allocation5], 12
        %1088 = vst.msk [vmem:[%s1087] sm:$0xf] %vm1031, %v1085
        %1089 = vst.msk [vmem:[#allocation6] sm:$0xff] %vm986, 0.0
        loop: start=0, step=1, limit=4
        $region137: #{tpu_custom_call.1} parent=75 // loop_pre_header
          _
        $region138: #{tpu_custom_call.1} parent=75 // loop_header
          %s1091 = sphi 0, %s1095
          %p1092 = scmp.ge.s32.totalorder %s1091, 4
        $region139: #{tpu_custom_call.1} parent=75 // loop_header_branch
          %1094 = sbr.rel (%p1092) target = $region143
        $region140: #{tpu_custom_call.1} parent=75 // loop_body
          %s1096 = smul.addr %s1091, 4
          %s1097 = scalar_lea.vmem [#allocation3], %s1096
          %v1098 = vld [vmem:[%s1097] sm:$0xf]
          %s1099 = smul.addr %s1091, 4
          %s1100 = scalar_lea.vmem [#allocation4], %s1099
          %v1101 = vld [vmem:[%s1100] sm:$0xf]
          %s1102 = smul.addr %s1091, 4
          %s1103 = scalar_lea.vmem [#allocation5], %s1102
          %v1104 = vld [vmem:[%s1103] sm:$0xf]
          %vm1105 = vcmask 64512
          %v1107 = vsel %vm1105, %v1098, 0
          %v1110 = vsel %vm1105, %v1101, 0
          %1112 = vmatprep.subr.bf16.mxu0 0
          %1113 = vmatpush1.bf16.xpose.msra.mxu0 %v1110
          %1114 = vmatprep.subr.bf16.mxu0 0
          %1115 = vmatpush1.bf16.xpose.msra.mxu0 0
          %1116 = vmatprep.subr.bf16.mxu0 0
          %1117 = vmatpush1.bf16.xpose.msra.mxu0 0
          %1118 = vmatprep.subr.bf16.mxu0 0
          %1119 = vmatpush1.bf16.xpose.msra.mxu0 0
          %1120 = vmatprep.subr.bf16.mxu0 0
          %1121 = vmatpush1.bf16.xpose.msra.mxu0 0
          %1122 = vmatprep.subr.bf16.mxu0 0
          %1123 = vmatpush1.bf16.xpose.msra.mxu0 0
          %1124 = vmatprep.subr.bf16.mxu0 0
          %1125 = vmatpush1.bf16.xpose.msra.mxu0 0
          %1126 = vmatprep.subr.bf16.mxu0 0
          %1127 = vmatpush1.bf16.xpose.msra.mxu0 0
          %1128 = vmatprep.subr.bf16.mxu0 0
          %1129 = vmatpush1.bf16.xpose.msra.mxu0 0
          %1130 = vmatprep.subr.bf16.mxu0 0
          %1131 = vmatpush1.bf16.xpose.msra.mxu0 0
          %1132 = vmatprep.subr.bf16.mxu0 0
          %1133 = vmatpush1.bf16.xpose.msra.mxu0 0
          %1134 = vmatprep.subr.bf16.mxu0 0
          %1135 = vmatpush1.bf16.xpose.msra.mxu0 0
          %1136 = vmatprep.subr.bf16.mxu0 0
          %1137 = vmatpush1.bf16.xpose.msra.mxu0 0
          %1138 = vmatprep.subr.bf16.mxu0 0
          %1139 = vmatpush1.bf16.xpose.msra.mxu0 0
          %1140 = vmatprep.subr.bf16.mxu0 0
          %1141 = vmatpush1.bf16.xpose.msra.mxu0 0
          %1142 = vmatprep.subr.bf16.mxu0 0
          %1143 = vmatpush1.bf16.xpose.msra.mxu0 0
          %1144 = vmatprep.mubr.bf16.mxu0 0
          %1145 = vmatmul.mubr.bf16.gmra.mrb[0].mxu0 %v1107
          %v1146 = vpop.f32.mrb[0].mxu0
          %v1147 = vadd.f32 %v960, %v1146
          %v1148 = vpop.f32.mrb[0].mxu0
          %v1149 = vpop.f32.mrb[0].mxu0
          %v1150 = vpop.f32.mrb[0].mxu0
          %1151 = vdwg.mxu0
          %v1152 = vsel %vm1105, %v1147, -inf
          %1153 = vmax.xlane.f32.xlu0 %v1152
          %v1154 = vpop.xlane.xlu0 %1153
          %v1155 = vsub.f32 %v1147, %v1154
          %v1156 = vmul.f32 %v1155, 1.442695
          %v1157 = vpow.pop %v1156
          %v1158 = vsel %vm1105, %v1157, 0.0
          %1159 = vadd.xlane.f32.xlu0 %v1158
          %v1160 = vpop.xlane.xlu0 %1159
          %v1161 = vrcp.pop %v1160
          %v1162 = vmul.f32 %v1157, %v1161
          %v1163 = vpack.c.bf16 %v1162, %v1162
          %v1165 = vsel %vm1105, %v1163, 0
          %vm1167 = vcmask 1043456
          %v1169 = vsel %vm1167, %v1104, 0
          %1171 = vmatprep.subr.bf16.mxu0 0
          %1172 = vmatpush1.bf16.msra.mxu0 %v1169
          %1173 = vmatprep.subr.bf16.mxu0 0
          %1174 = vmatpush1.bf16.msra.mxu0 0
          %1175 = vmatprep.subr.bf16.mxu0 0
          %1176 = vmatpush1.bf16.msra.mxu0 0
          %1177 = vmatprep.subr.bf16.mxu0 0
          %1178 = vmatpush1.bf16.msra.mxu0 0
          %1179 = vmatprep.subr.bf16.mxu0 0
          %1180 = vmatpush1.bf16.msra.mxu0 0
          %1181 = vmatprep.subr.bf16.mxu0 0
          %1182 = vmatpush1.bf16.msra.mxu0 0
          %1183 = vmatprep.subr.bf16.mxu0 0
          %1184 = vmatpush1.bf16.msra.mxu0 0
          %1185 = vmatprep.subr.bf16.mxu0 0
          %1186 = vmatpush1.bf16.msra.mxu0 0
          %1187 = vmatprep.subr.bf16.mxu0 0
          %1188 = vmatpush1.bf16.msra.mxu0 0
          %1189 = vmatprep.subr.bf16.mxu0 0
          %1190 = vmatpush1.bf16.msra.mxu0 0
          %1191 = vmatprep.subr.bf16.mxu0 0
          %1192 = vmatpush1.bf16.msra.mxu0 0
          %1193 = vmatprep.subr.bf16.mxu0 0
          %1194 = vmatpush1.bf16.msra.mxu0 0
          %1195 = vmatprep.subr.bf16.mxu0 0
          %1196 = vmatpush1.bf16.msra.mxu0 0
          %1197 = vmatprep.subr.bf16.mxu0 0
          %1198 = vmatpush1.bf16.msra.mxu0 0
          %1199 = vmatprep.subr.bf16.mxu0 0
          %1200 = vmatpush1.bf16.msra.mxu0 0
          %1201 = vmatprep.subr.bf16.mxu0 0
          %1202 = vmatpush1.bf16.msra.mxu0 0
          %1203 = vmatprep.mubr.bf16.mxu0 0
          %1204 = vmatmul.mubr.bf16.gmra.mrb[0].mxu0 %v1165
          %v1205 = vpop.f32.mrb[0].mxu0
          %v1206 = vadd.f32 0.0, %v1205
          %v1207 = vpop.f32.mrb[0].mxu0
          %v1208 = vpop.f32.mrb[0].mxu0
          %v1209 = vpop.f32.mrb[0].mxu0
          %1210 = vdwg.mxu0
          %v1211 = vld [vmem:[#allocation6] sm:$0xff]
          %v1212 = vpack.c.bf16 %v1206, %v1206
          %s1213 = smul.addr %s1091, 4
          %s1214 = scalar_lea.vmem %s770, %s1213 [#allocation15]
          %v1215 = vld [vmem:[%s1214] sm:$0xf]
          %v1217 = vsel %vm1105, %v1212, 0
          %v1220 = vsel %vm1167, %v1215, 0
          %1222 = vmatprep.subr.bf16.mxu0 0
          %1223 = vmatpush1.bf16.msra.mxu0 %v1220
          %1224 = vmatprep.subr.bf16.mxu0 0
          %1225 = vmatpush1.bf16.msra.mxu0 0
          %1226 = vmatprep.subr.bf16.mxu0 0
          %1227 = vmatpush1.bf16.msra.mxu0 0
          %1228 = vmatprep.subr.bf16.mxu0 0
          %1229 = vmatpush1.bf16.msra.mxu0 0
          %1230 = vmatprep.subr.bf16.mxu0 0
          %1231 = vmatpush1.bf16.msra.mxu0 0
          %1232 = vmatprep.subr.bf16.mxu0 0
          %1233 = vmatpush1.bf16.msra.mxu0 0
          %1234 = vmatprep.subr.bf16.mxu0 0
          %1235 = vmatpush1.bf16.msra.mxu0 0
          %1236 = vmatprep.subr.bf16.mxu0 0
          %1237 = vmatpush1.bf16.msra.mxu0 0
          %1238 = vmatprep.subr.bf16.mxu0 0
          %1239 = vmatpush1.bf16.msra.mxu0 0
          %1240 = vmatprep.subr.bf16.mxu0 0
          %1241 = vmatpush1.bf16.msra.mxu0 0
          %1242 = vmatprep.subr.bf16.mxu0 0
          %1243 = vmatpush1.bf16.msra.mxu0 0
          %1244 = vmatprep.subr.bf16.mxu0 0
          %1245 = vmatpush1.bf16.msra.mxu0 0
          %1246 = vmatprep.subr.bf16.mxu0 0
          %1247 = vmatpush1.bf16.msra.mxu0 0
          %1248 = vmatprep.subr.bf16.mxu0 0
          %1249 = vmatpush1.bf16.msra.mxu0 0
          %1250 = vmatprep.subr.bf16.mxu0 0
          %1251 = vmatpush1.bf16.msra.mxu0 0
          %1252 = vmatprep.subr.bf16.mxu0 0
          %1253 = vmatpush1.bf16.msra.mxu0 0
          %1254 = vmatprep.mubr.bf16.mxu0 0
          %1255 = vmatmul.mubr.bf16.gmra.mrb[0].mxu0 %v1217
          %v1256 = vpop.f32.mrb[0].mxu0
          %v1257 = vadd.f32 0.0, %v1256
          %v1258 = vpop.f32.mrb[0].mxu0
          %v1259 = vpop.f32.mrb[0].mxu0
          %v1260 = vpop.f32.mrb[0].mxu0
          %1261 = vdwg.mxu0
          %v1262 = vadd.f32 %v1211, %v1257
          %1263 = vst.msk [vmem:[#allocation6] sm:$0xff] %vm986, %v1262
        $region141: #{tpu_custom_call.1} parent=75 // loop_footer
          %s1095 = sadd.s32 1, %s1091
        $region142: #{tpu_custom_call.1} parent=75 // loop_footer_branch
          %1090 = sbr.rel target = $region138
        $region143: #{tpu_custom_call.1} parent=75 // loop_exit
          _
        %v1264 = vld [vmem:[#allocation6] sm:$0xff]
        %v1265 = vld [vmem:[%s778] sm:$0x1]
        %v1267 = vlaneseq
        %v1268 = vshrl.u32 %v1267, 7
        %v1269 = vsub.s32 0, %v1268
        %v1270 = vrot.slane %v1265, %v1269
        %v1272 = vadd.f32 %v1264, %v1270
        %v1273 = vadd.f32 %v1272, %v954
        %v1274 = vld [vmem:[%s786] sm:$0x1]
        %v1275 = vld [vmem:[%s794] sm:$0x1]
        %v1276 = vsel %vm986, %v1273, 0.0
        %1277 = vadd.xlane.f32.xlu0 %v1276
        %v1278 = vpop.xlane.xlu0 %1277
        %v1279 = vrcp.pop 32.0
        %v1280 = vmul.f32 %v1278, %v1279
        %v1281 = vsub.f32 %v1273, %v1280
        %v1282 = vmul.f32 %v1281, %v1281
        %v1283 = vsel %vm986, %v1282, 0.0
        %1284 = vadd.xlane.f32.xlu0 %v1283
        %v1285 = vpop.xlane.xlu0 %1284
        %v1286 = vmul.f32 %v1285, %v1279
        %v1287 = vadd.f32 %v1286, 1e-12
        %v1288 = vrsqrt.pop %v1287
        %v1289 = vmul.f32 %v1281, %v1288
        %v1291 = vlaneseq
        %v1292 = vshrl.u32 %v1291, 7
        %v1293 = vsub.s32 0, %v1292
        %v1294 = vrot.slane %v1274, %v1293
        %v1296 = vmul.f32 %v1289, %v1294
        %v1298 = vlaneseq
        %v1299 = vshrl.u32 %v1298, 7
        %v1300 = vsub.s32 0, %v1299
        %v1301 = vrot.slane %v1275, %v1300
        %v1303 = vadd.f32 %v1296, %v1301
        %v1304 = vpack.c.bf16 %v1303, %v1303
        %v1305 = vld [vmem:[%s803] sm:$0xf]
        %v1306 = vld [vmem:[%s803 + $0x4] sm:$0xf]
        %v1307 = vld [vmem:[%s803 + $0x8] sm:$0xf]
        %v1308 = vld [vmem:[%s803 + $0xc] sm:$0xf]
        %v1309 = vld [vmem:[%s811] sm:$0x1]
        %v1311 = vlaneseq
        %v1312 = vshrl.u32 %v1311, 7
        %v1313 = vsub.s32 0, %v1312
        %v1314 = vrot.slane %v1309, %v1313
        %v1320 = vunpack.c.l.b16 %v1305
        %v1321 = vunpack.c.l.b16 %v1306
        %v1322 = vunpack.c.l.b16 %v1307
        %v1323 = vunpack.c.l.b16 %v1308
        %v1324 = vpack.c.b16 %v1321, %v1320
        %v1325 = vpack.c.b16 %v1323, %v1322
        %v1329 = vsel %vm986, %v1304, 0
        %1331 = vmatprep.subr.bf16.mxu0 0
        %1332 = vmatpush1.bf16.msra.mxu0 %v1324
        %1333 = vmatprep.subr.bf16.mxu0 0
        %1334 = vmatpush1.bf16.msra.mxu0 %v1325
        %1335 = vmatprep.subr.bf16.mxu0 0
        %1336 = vmatpush1.bf16.msra.mxu0 0
        %1337 = vmatprep.subr.bf16.mxu0 0
        %1338 = vmatpush1.bf16.msra.mxu0 0
        %1339 = vmatprep.subr.bf16.mxu0 0
        %1340 = vmatpush1.bf16.msra.mxu0 0
        %1341 = vmatprep.subr.bf16.mxu0 0
        %1342 = vmatpush1.bf16.msra.mxu0 0
        %1343 = vmatprep.subr.bf16.mxu0 0
        %1344 = vmatpush1.bf16.msra.mxu0 0
        %1345 = vmatprep.subr.bf16.mxu0 0
        %1346 = vmatpush1.bf16.msra.mxu0 0
        %1347 = vmatprep.subr.bf16.mxu0 0
        %1348 = vmatpush1.bf16.msra.mxu0 0
        %1349 = vmatprep.subr.bf16.mxu0 0
        %1350 = vmatpush1.bf16.msra.mxu0 0
        %1351 = vmatprep.subr.bf16.mxu0 0
        %1352 = vmatpush1.bf16.msra.mxu0 0
        %1353 = vmatprep.subr.bf16.mxu0 0
        %1354 = vmatpush1.bf16.msra.mxu0 0
        %1355 = vmatprep.subr.bf16.mxu0 0
        %1356 = vmatpush1.bf16.msra.mxu0 0
        %1357 = vmatprep.subr.bf16.mxu0 0
        %1358 = vmatpush1.bf16.msra.mxu0 0
        %1359 = vmatprep.subr.bf16.mxu0 0
        %1360 = vmatpush1.bf16.msra.mxu0 0
        %1361 = vmatprep.subr.bf16.mxu0 0
        %1362 = vmatpush1.bf16.msra.mxu0 0
        %1363 = vmatprep.mubr.bf16.mxu0 0
        %1364 = vmatmul.mubr.bf16.gmra.mrb[0].mxu0 %v1329
        %v1365 = vpop.f32.mrb[0].mxu0
        %v1366 = vadd.f32 %v1314, %v1365
        %v1367 = vpop.f32.mrb[0].mxu0
        %v1368 = vpop.f32.mrb[0].mxu0
        %v1369 = vpop.f32.mrb[0].mxu0
        %1370 = vdwg.mxu0
        %v1371 = vmul.f32 %v1366, 0.5
        %v1372 = vmul.f32 %v1366, 0.044715
        %v1373 = vmul.f32 %v1372, %v1366
        %v1374 = vmul.f32 %v1373, %v1366
        %v1375 = vadd.f32 %v1366, %v1374
        %v1376 = vmul.f32 %v1375, 0.7978846
        %v1377 = vtanh.pop %v1376
        %v1378 = vadd.f32 %v1377, 1.0
        %v1379 = vmul.f32 %v1371, %v1378
        %v1380 = vpack.c.bf16 %v1379, %v1379
        %v1381 = vld [vmem:[%s820] sm:$0xf]
        %v1382 = vld [vmem:[%s820 + $0x4] sm:$0xf]
        %v1383 = vld [vmem:[%s820 + $0x8] sm:$0xf]
        %v1384 = vld [vmem:[%s820 + $0xc] sm:$0xf]
        %v1385 = vld [vmem:[%s820 + $0x10] sm:$0xf]
        %v1386 = vld [vmem:[%s820 + $0x14] sm:$0xf]
        %v1387 = vld [vmem:[%s820 + $0x18] sm:$0xf]
        %v1388 = vld [vmem:[%s820 + $0x1c] sm:$0xf]
        %v1389 = vld [vmem:[%s828] sm:$0x1]
        %v1391 = vlaneseq
        %v1392 = vshrl.u32 %v1391, 7
        %v1393 = vsub.s32 0, %v1392
        %v1394 = vrot.slane %v1389, %v1393
        %v1404 = vunpack.c.l.b16 %v1381
        %v1405 = vunpack.c.l.b16 %v1382
        %v1406 = vunpack.c.l.b16 %v1383
        %v1407 = vunpack.c.l.b16 %v1384
        %v1408 = vunpack.c.l.b16 %v1385
        %v1409 = vunpack.c.l.b16 %v1386
        %v1410 = vunpack.c.l.b16 %v1387
        %v1411 = vunpack.c.l.b16 %v1388
        %v1412 = vpack.c.b16 %v1405, %v1404
        %v1413 = vpack.c.b16 %v1407, %v1406
        %v1414 = vpack.c.b16 %v1409, %v1408
        %v1415 = vpack.c.b16 %v1411, %v1410
        %vm1420 = vcmask 523264
        %v1422 = vsel %vm1420, %v1380, 0
        %1424 = vmatprep.subr.bf16.mxu0 0
        %1425 = vmatpush1.bf16.msra.mxu0 %v1412
        %1426 = vmatprep.subr.bf16.mxu0 0
        %1427 = vmatpush1.bf16.msra.mxu0 %v1413
        %1428 = vmatprep.subr.bf16.mxu0 0
        %1429 = vmatpush1.bf16.msra.mxu0 %v1414
        %1430 = vmatprep.subr.bf16.mxu0 0
        %1431 = vmatpush1.bf16.msra.mxu0 %v1415
        %1432 = vmatprep.subr.bf16.mxu0 0
        %1433 = vmatpush1.bf16.msra.mxu0 0
        %1434 = vmatprep.subr.bf16.mxu0 0
        %1435 = vmatpush1.bf16.msra.mxu0 0
        %1436 = vmatprep.subr.bf16.mxu0 0
        %1437 = vmatpush1.bf16.msra.mxu0 0
        %1438 = vmatprep.subr.bf16.mxu0 0
        %1439 = vmatpush1.bf16.msra.mxu0 0
        %1440 = vmatprep.subr.bf16.mxu0 0
        %1441 = vmatpush1.bf16.msra.mxu0 0
        %1442 = vmatprep.subr.bf16.mxu0 0
        %1443 = vmatpush1.bf16.msra.mxu0 0
        %1444 = vmatprep.subr.bf16.mxu0 0
        %1445 = vmatpush1.bf16.msra.mxu0 0
        %1446 = vmatprep.subr.bf16.mxu0 0
        %1447 = vmatpush1.bf16.msra.mxu0 0
        %1448 = vmatprep.subr.bf16.mxu0 0
        %1449 = vmatpush1.bf16.msra.mxu0 0
        %1450 = vmatprep.subr.bf16.mxu0 0
        %1451 = vmatpush1.bf16.msra.mxu0 0
        %1452 = vmatprep.subr.bf16.mxu0 0
        %1453 = vmatpush1.bf16.msra.mxu0 0
        %1454 = vmatprep.subr.bf16.mxu0 0
        %1455 = vmatpush1.bf16.msra.mxu0 0
        %1456 = vmatprep.mubr.bf16.mxu0 0
        %1457 = vmatmul.mubr.bf16.gmra.mrb[0].mxu0 %v1422
        %v1458 = vpop.f32.mrb[0].mxu0
        %v1459 = vadd.f32 %v1394, %v1458
        %v1460 = vpop.f32.mrb[0].mxu0
        %v1461 = vpop.f32.mrb[0].mxu0
        %v1462 = vpop.f32.mrb[0].mxu0
        %1463 = vdwg.mxu0
        %v1464 = vadd.f32 %v1459, %v1303
        %v1465 = vld [vmem:[%s836] sm:$0x1]
        %v1466 = vld [vmem:[%s844] sm:$0x1]
        %v1467 = vsel %vm986, %v1464, 0.0
        %1468 = vadd.xlane.f32.xlu0 %v1467
        %v1469 = vpop.xlane.xlu0 %1468
        %v1470 = vmul.f32 %v1469, %v1279
        %v1471 = vsub.f32 %v1464, %v1470
        %v1472 = vmul.f32 %v1471, %v1471
        %v1473 = vsel %vm986, %v1472, 0.0
        %1474 = vadd.xlane.f32.xlu0 %v1473
        %v1475 = vpop.xlane.xlu0 %1474
        %v1476 = vmul.f32 %v1475, %v1279
        %v1477 = vadd.f32 %v1476, 1e-12
        %v1478 = vrsqrt.pop %v1477
        %v1479 = vmul.f32 %v1471, %v1478
        %v1481 = vlaneseq
        %v1482 = vshrl.u32 %v1481, 7
        %v1483 = vsub.s32 0, %v1482
        %v1484 = vrot.slane %v1465, %v1483
        %v1486 = vmul.f32 %v1479, %v1484
        %v1488 = vlaneseq
        %v1489 = vshrl.u32 %v1488, 7
        %v1490 = vsub.s32 0, %v1489
        %v1491 = vrot.slane %v1466, %v1490
        %v1493 = vadd.f32 %v1486, %v1491
        %1494 = vst.msk [vmem:[#allocation2] sm:$0xff] %vm986, %v1493
        %v1495 = vpack.c.bf16 %v1493, %v1493
        %vm1496 = vcmask 257024
        %1497 = vst.msk [vmem:[%s944] sm:$0xf] %vm1496, %v1495
        %s1498 = sand.u32 %s438, 1
        %s1499 = scalar_lea.sflag [#allocation9], %s1498
        %s1500 = sand.u32 %s438, 1
        %s1501 = smul.addr %s1500, 4
        %s1502 = scalar_lea.vmem [#allocation30], %s1501
        // Predicated region
        $region144: #{tpu_custom_call.1} parent=75 // pred_check
          %p1503 = pneg %p448
        $region145: #{tpu_custom_call.1} parent=75 // pred_check_branch
          %1505 = sbr.rel (%p1503) target = $region147
        $region146: #{tpu_custom_call.1} parent=75 // pred_region
          %s1507 = ssub.s32 64, 64
          %1508 = vsyncadd %s1499, %s1507
          %s1509 = smul.addr %s57, 2
          %s1510 = sadd.s32 %s56, %s1509
          %s1511 = smul.addr %s1510, 64
          %s1512 = scalar_lea.hbm %s14, %s1511
          %s1514 = sshll.u32 %s1502, 4
          %s1515 = int_to_ptr.vmem [resolvable:$true] %s1514
          %1517 = dma.vmem_to_hbm [thread:$0]  %s1515, 64, %s1512, %s1499
        $region147: #{tpu_custom_call.1} parent=75 // pred_fallthru
          _
      $region76: #{tpu_custom_call.1} parent=5 // pred_fallthru
        _
      %p1518 = scmp.le.s32.totalorder 2, %s47
      // Predicated region
      $region148: #{tpu_custom_call.1} parent=5 // pred_check
        %p1519 = pneg %p1518
      $region149: #{tpu_custom_call.1} parent=5 // pred_check_branch
        %1521 = sbr.rel (%p1519) target = $region151
      $region150: #{tpu_custom_call.1} parent=5 // pred_region
        %s1522 = ssub.s32 %s47, 2
        // Predicated region
        $region152: #{tpu_custom_call.1} parent=150 // pred_check
          %p1523 = pneg %p454
        $region153: #{tpu_custom_call.1} parent=150 // pred_check_branch
          %1525 = sbr.rel (%p1523) target = $region155
        $region154: #{tpu_custom_call.1} parent=150 // pred_region
          %s1526 = sand.u32 %s439, 1
          %s1527 = scalar_lea.sflag [#allocation9], %s1526
          %s1528 = sand.u32 %s439, 1
          %s1529 = smul.addr %s1528, 4
          %s1530 = scalar_lea.vmem [#allocation30], %s1529
          %1531 = dma.done %s1527, 64
        $region155: #{tpu_custom_call.1} parent=150 // pred_fallthru
          _
      $region151: #{tpu_custom_call.1} parent=5 // pred_fallthru
        _
    $region6: #{tpu_custom_call.1} parent=1 // loop_footer
      %s51 = sadd.s32 1, %s47
    $region7: #{tpu_custom_call.1} parent=1 // loop_footer_branch
      %46 = sbr.rel target = $region3
    $region8: #{tpu_custom_call.1} parent=1 // loop_exit
      _
    %1532 = vsyncpa [#allocation8], 1
    %s1533 = scalar_lea.sflag [#allocation8], 1
    %1534 = vsyncpa %s1533, 1
    %1535 = vsyncpa [#allocation11], 1
    %s1536 = scalar_lea.sflag [#allocation11], 1
    %1537 = vsyncpa %s1536, 1
    %1538 = vsyncpa [#allocation14], 1
    %s1539 = scalar_lea.sflag [#allocation14], 1
    %1540 = vsyncpa %s1539, 1
    %1541 = vsyncpa [#allocation17], 1
    %s1542 = scalar_lea.sflag [#allocation17], 1
    %1543 = vsyncpa %s1542, 1
    %1544 = vsyncpa [#allocation20], 1
    %s1545 = scalar_lea.sflag [#allocation20], 1
    %1546 = vsyncpa %s1545, 1
    %1547 = vsyncpa [#allocation23], 1
    %s1548 = scalar_lea.sflag [#allocation23], 1
    %1549 = vsyncpa %s1548, 1
    %1550 = vsyncpa [#allocation26], 1
    %s1551 = scalar_lea.sflag [#allocation26], 1
    %1552 = vsyncpa %s1551, 1
    %1553 = vsyncpa [#allocation29], 1
    %s1554 = scalar_lea.sflag [#allocation29], 1
    %1555 = vsyncpa %s1554, 1
    %1556 = vsyncpa [#allocation9], 1
    %s1557 = scalar_lea.sflag [#allocation9], 1
    %1558 = vsyncpa %s1557, 1

</llo_original>
